<compile_context>
chip_gen: v7x
topology: tpu7x:2x2x1
jax: 0.10.0
libtpu: 0.0.40
codegen_flags: <defaults>
</compile_context>

<pallas_src>
import functools

import jax
import jax.numpy as jnp
from jax import lax
from jax.experimental import pallas as pl
from jax.experimental.pallas import tpu as pltpu


CFG = dict(hidden=32, heads=2, intermediate=64, layers=1,
           vocab=50, max_pos=32, type_vocab=2)

_LANES = 128  # pad kernel outputs to full lane width -> unmasked vst


def _vmem_spec():
    """Whole-array block resident in VMEM (no grid, no pipelining)."""
    return pl.BlockSpec(memory_space=pltpu.MemorySpace.VMEM)


def _ln(v, g, b):
    mu = jnp.mean(v, axis=-1, keepdims=True)
    var = jnp.mean((v - mu) ** 2, axis=-1, keepdims=True)
    return (v - mu) * lax.rsqrt(var + 1e-12) * g + b


def _mm(a, b):
    """MXU matmul: bf16 operands, f32 accumulation."""
    return jnp.dot(a.astype(jnp.bfloat16), b.astype(jnp.bfloat16),
                   preferred_element_type=jnp.float32)


# ----------------------------------------------------------------------------
# One BERT layer on SSA values (no VMEM scratch, batched attention)
# ----------------------------------------------------------------------------
def _transformer_layer(x, bias, wqkv, bqkv, wo, bo, ln1_g, ln1_b,
                       w1, b1, w2, b2, ln2_g, ln2_b, *, B, S, nH, dh):
    f32 = jnp.float32
    bf = jnp.bfloat16
    H = nH * dh

    qkv = _mm(x, wqkv) + bqkv                         # (M, 3H), fused Q|K|V
    q = qkv[:, :H] * (1.0 / float(dh) ** 0.5)         # fold 1/sqrt(dh) into Q
    k = qkv[:, H:2 * H]
    v = qkv[:, 2 * H:]

    def split_heads(z):                               # (M, H) -> (nH*B, S, dh)
        return jnp.concatenate(
            [z[:, h * dh:(h + 1) * dh].reshape(B, S, dh) for h in range(nH)],
            axis=0)

    qb, kb, vb = split_heads(q), split_heads(k), split_heads(v)

    # Single batched score matmul + single softmax over all (head, batch) tiles.
    s = jnp.einsum("bqd,bkd->bqk", qb.astype(bf), kb.astype(bf),
                   preferred_element_type=f32)        # (nH*B, S, S)
    bias_bh = jnp.concatenate([bias] * nH, axis=0)[:, None, :]   # (nH*B, 1, S)
    p = jax.nn.softmax(s + bias_bh, axis=-1)
    ctx = jnp.einsum("bqk,bkd->bqd", p.astype(bf), vb.astype(bf),
                     preferred_element_type=f32)      # (nH*B, S, dh)
    ctx = jnp.concatenate(
        [ctx[h * B:(h + 1) * B].reshape(B * S, dh) for h in range(nH)],
        axis=1)                                       # (M, H)

    attn = _mm(ctx, wo) + bo
    h1 = _ln(x + attn, ln1_g, ln1_b)
    # TODO(synk): PyTorch nn.GELU defaults to exact erf GELU; the tanh
    # approximation is used here because it lowers cleanly on all TPU gens.
    ffn = jax.nn.gelu(_mm(h1, w1) + b1)
    ffn = _mm(ffn, w2) + b2
    return _ln(h1 + ffn, ln2_g, ln2_b)


# ----------------------------------------------------------------------------
# Mega-kernel: (embedding LN) + layer + gather + pooler/action/domain heads
# ----------------------------------------------------------------------------
def _encoder_kernel(x_ref, bias_ref, gat_ref, pre_g_ref, pre_b_ref,
                    wqkv_ref, bqkv_ref, wo_ref, bo_ref,
                    ln1_g_ref, ln1_b_ref, w1_ref, b1_ref, w2_ref, b2_ref,
                    ln2_g_ref, ln2_b_ref,
                    pw_ref, pb_ref, aw_ref, ab_ref, dw_ref, db_ref,
                    seq_ref, heads_ref,
                    *, B, S, nH, dh, n_op, n_domain, apply_pre_ln):
    f32 = jnp.float32
    H = nH * dh
    M = B * S

    x = x_ref[...].astype(f32)
    if apply_pre_ln:                                  # embedding LayerNorm fused in
        x = _ln(x, pre_g_ref[...], pre_b_ref[...])

    x = _transformer_layer(
        x, bias_ref[...],
        wqkv_ref[...], bqkv_ref[...], wo_ref[...], bo_ref[...],
        ln1_g_ref[...], ln1_b_ref[...], w1_ref[...], b1_ref[...],
        w2_ref[...], b2_ref[...], ln2_g_ref[...], ln2_b_ref[...],
        B=B, S=S, nH=nH, dh=dh)                       # (M, H) f32

    # Lane-dense store of the sequence output (pad H -> 128 lanes).
    seq_ref[...] = jnp.concatenate(
        [x, jnp.zeros((M, _LANES - H), f32)], axis=1).astype(seq_ref.dtype)

    # [CLS] + state-position gather as one tiny one-hot matmul (exact in f32),
    # then pooler (tanh), action_cls and domain_cls heads — all in vregs.
    rows = jnp.dot(gat_ref[...], x, preferred_element_type=f32)  # (B+B*J, H)
    cls_tok = rows[:B]
    st_rows = rows[B:]
    pooled = jnp.tanh(_mm(cls_tok, pw_ref[...]) + pb_ref[...])   # (B, H)
    dom = _mm(pooled, dw_ref[...]) + db_ref[...]                 # (B, n_domain)
    st_scores = _mm(st_rows, aw_ref[...]) + ab_ref[...]          # (B*J, n_op)

    # Pack everything into one lane-dense (B+B*J, 128) slab; single store.
    bj = st_rows.shape[0]
    top = jnp.concatenate(
        [pooled, dom, jnp.zeros((B, _LANES - H - n_domain), f32)], axis=1)
    bot = jnp.concatenate(
        [st_rows, st_scores, jnp.zeros((bj, _LANES - H - n_op), f32)], axis=1)
    heads_ref[...] = jnp.concatenate([top, bot], axis=0).astype(heads_ref.dtype)


def fused_final_layer(x2, mask_bias, gat, lp, pre_ln, head_p,
                      *, B, S, n_op, n_domain, cfg):
    H, nH = cfg["hidden"], cfg["heads"]
    dh = H // nH
    M = B * S
    R = gat.shape[0]
    assert H + n_domain <= _LANES and H + n_op <= _LANES

    apply_pre = pre_ln is not None
    pre_g = (pre_ln[0] if apply_pre else jnp.ones((H,), jnp.float32))[None, :]
    pre_b = (pre_ln[1] if apply_pre else jnp.zeros((H,), jnp.float32))[None, :]

    kernel = functools.partial(_encoder_kernel, B=B, S=S, nH=nH, dh=dh,
                               n_op=n_op, n_domain=n_domain,
                               apply_pre_ln=apply_pre)
    return pl.pallas_call(
        kernel,
        out_shape=(jax.ShapeDtypeStruct((M, _LANES), jnp.float32),
                   jax.ShapeDtypeStruct((R, _LANES), jnp.float32)),
        in_specs=[_vmem_spec() for _ in range(23)],
        out_specs=(_vmem_spec(), _vmem_spec()),
    )(x2, mask_bias, gat, pre_g, pre_b, *_layer_inputs(lp),
      head_p["pool_w"], head_p["pool_b"][None, :],
      head_p["action_w"], head_p["action_b"][None, :],
      head_p["domain_w"], head_p["domain_b"][None, :])


# ----------------------------------------------------------------------------
# Plain fused layer kernel (only used when cfg["layers"] > 1)
# ----------------------------------------------------------------------------
def _layer_kernel(x_ref, bias_ref, pre_g_ref, pre_b_ref,
                  wqkv_ref, bqkv_ref, wo_ref, bo_ref,
                  ln1_g_ref, ln1_b_ref, w1_ref, b1_ref, w2_ref, b2_ref,
                  ln2_g_ref, ln2_b_ref, o_ref, *, B, S, nH, dh, apply_pre_ln):
    x = x_ref[...].astype(jnp.float32)
    if apply_pre_ln:
        x = _ln(x, pre_g_ref[...], pre_b_ref[...])
    x = _transformer_layer(
        x, bias_ref[...],
        wqkv_ref[...], bqkv_ref[...], wo_ref[...], bo_ref[...],
        ln1_g_ref[...], ln1_b_ref[...], w1_ref[...], b1_ref[...],
        w2_ref[...], b2_ref[...], ln2_g_ref[...], ln2_b_ref[...],
        B=B, S=S, nH=nH, dh=dh)
    o_ref[...] = x.astype(o_ref.dtype)


def fused_bert_layer(x2, mask_bias, lp, pre_ln, *, B, S, cfg):
    H, nH = cfg["hidden"], cfg["heads"]
    dh = H // nH
    apply_pre = pre_ln is not None
    pre_g = (pre_ln[0] if apply_pre else jnp.ones((H,), jnp.float32))[None, :]
    pre_b = (pre_ln[1] if apply_pre else jnp.zeros((H,), jnp.float32))[None, :]
    kernel = functools.partial(_layer_kernel, B=B, S=S, nH=nH, dh=dh,
                               apply_pre_ln=apply_pre)
    return pl.pallas_call(
        kernel,
        out_shape=jax.ShapeDtypeStruct((B * S, H), jnp.float32),
        in_specs=[_vmem_spec() for _ in range(16)],
        out_specs=_vmem_spec(),
    )(x2, mask_bias, pre_g, pre_b, *_layer_inputs(lp))


def _layer_inputs(lp):
    return (lp["wqkv"], lp["bqkv"][None, :], lp["wo"], lp["bo"][None, :],
            lp["ln1_g"][None, :], lp["ln1_b"][None, :],
            lp["w1"], lp["b1"][None, :], lp["w2"], lp["b2"][None, :],
            lp["ln2_g"][None, :], lp["ln2_b"][None, :])


# ----------------------------------------------------------------------------
# Synthetic BERT backbone params (deterministic init)
# ----------------------------------------------------------------------------
def init_params(key, n_op, n_domain, cfg=CFG):
    H, I = cfg["hidden"], cfg["intermediate"]

    def nrm(k, shape):
        return 0.02 * jax.random.normal(k, shape, jnp.float32)

    keys = iter(jax.random.split(key, 64))
    p = {
        "word_emb": nrm(next(keys), (cfg["vocab"], H)),
        "pos_emb":  nrm(next(keys), (cfg["max_pos"], H)),
        "type_emb": nrm(next(keys), (cfg["type_vocab"], H)),
        "emb_ln_g": jnp.ones((H,), jnp.float32),
        "emb_ln_b": jnp.zeros((H,), jnp.float32),
        "pool_w": nrm(next(keys), (H, H)),
        "pool_b": jnp.zeros((H,), jnp.float32),
        "action_w": nrm(next(keys), (H, n_op)),
        "action_b": jnp.zeros((n_op,), jnp.float32),
        "domain_w": nrm(next(keys), (H, n_domain)),
        "domain_b": jnp.zeros((n_domain,), jnp.float32),
        "layers": [],
    }
    for _ in range(cfg["layers"]):
        p["layers"].append({
            "wqkv": nrm(next(keys), (H, 3 * H)),
            "bqkv": jnp.zeros((3 * H,), jnp.float32),
            "wo": nrm(next(keys), (H, H)), "bo": jnp.zeros((H,), jnp.float32),
            "ln1_g": jnp.ones((H,), jnp.float32), "ln1_b": jnp.zeros((H,), jnp.float32),
            "w1": nrm(next(keys), (H, I)), "b1": jnp.zeros((I,), jnp.float32),
            "w2": nrm(next(keys), (I, H)), "b2": jnp.zeros((H,), jnp.float32),
            "ln2_g": jnp.ones((H,), jnp.float32), "ln2_b": jnp.zeros((H,), jnp.float32),
        })
    return p


# ----------------------------------------------------------------------------
# Encoder.forward
# ----------------------------------------------------------------------------
def encoder_forward(params, input_ids, token_type_ids, state_positions,
                    attention_mask, op_ids=None, max_update=None, *,
                    n_op, n_domain, update_id, exclude_domain=False, cfg=CFG):
    H = cfg["hidden"]
    B, S = input_ids.shape
    J = state_positions.shape[1]

    # Embedding lookup stays in XLA (dynamic vocab gather).
    emb = (params["word_emb"][input_ids]
           + params["pos_emb"][jnp.arange(S)][None, :, :]
           + params["type_emb"][token_type_ids])                     # (B, S, H)
    mask_bias = (1.0 - attention_mask.astype(jnp.float32)) * (-1e9)  # (B, S)
    x2 = emb.reshape(B * S, H)

    layers = params["layers"]
    for li, lp in enumerate(layers[:-1]):
        pre = (params["emb_ln_g"], params["emb_ln_b"]) if li == 0 else None
        x2 = fused_bert_layer(x2, mask_bias, lp, pre, B=B, S=S, cfg=cfg)

    # One-hot gather matrix: rows 0..B-1 -> [CLS] tokens, then B*J state rows.
    flat_cls = jnp.arange(B, dtype=jnp.int32) * S
    flat_state = (jnp.arange(B, dtype=jnp.int32)[:, None] * S
                  + state_positions.astype(jnp.int32)).reshape(-1)
    flat_pos = jnp.concatenate([flat_cls, flat_state])               # (B + B*J,)
    gat = (flat_pos[:, None] == jnp.arange(B * S)[None, :]).astype(jnp.float32)

    pre = ((params["emb_ln_g"], params["emb_ln_b"]) if len(layers) == 1 else None)
    seq_slab, heads_slab = fused_final_layer(
        x2, mask_bias, gat, layers[-1], pre, params,
        B=B, S=S, n_op=n_op, n_domain=n_domain, cfg=cfg)

    # Slice the lane-dense slabs apart (cheap XLA slices).
    sequence_output = seq_slab[:, :H].reshape(B, S, H)
    pooled_output = heads_slab[:B, :H]
    domain_scores = heads_slab[:B, H:H + n_domain]
    state_output = heads_slab[B:, :H].reshape(B, J, H)
    state_scores = heads_slab[B:, H:H + n_op].reshape(B, J, n_op)

    if exclude_domain:
        domain_scores = jnp.zeros((1,), jnp.float32)

    if op_ids is None:
        op_ids = jnp.argmax(state_scores.reshape(-1, n_op), axis=-1).reshape(B, J)

    # decoder_inputs: compact the "update" rows to the front, zero padding.
    upd = (op_ids == update_id)                                      # (B, J)
    dest = jnp.where(upd, jnp.cumsum(upd, axis=1) - 1, J)
    b_idx = jnp.broadcast_to(jnp.arange(B)[:, None], (B, J))
    dec = jnp.zeros((B, J + 1, H), state_output.dtype)
    dec = dec.at[b_idx, dest].set(jnp.where(upd[..., None], state_output, 0.0))
    dec_padded = dec[:, :J]

    if max_update is None:
        # TODO(synk): PyTorch computes max_update via a device->host .item()
        # sync; we keep the static upper bound J instead (extra columns are
        # zero) to avoid the host round-trip and shape-dependent recompiles.
        max_update = J
    decoder_inputs = dec_padded[:, :max_update]

    return (domain_scores, state_scores, decoder_inputs,
            sequence_output, pooled_output[None])                    # pooled.unsqueeze(0)


# ----------------------------------------------------------------------------
# Pure-JAX reference (same math incl. bf16 MXU operands) for correctness check
# ----------------------------------------------------------------------------
def _ref_forward(params, input_ids, token_type_ids, attention_mask,
                 state_positions, cfg=CFG):
    B, S = input_ids.shape
    H, nH = cfg["hidden"], cfg["heads"]
    dh = H // nH
    bf, f32 = jnp.bfloat16, jnp.float32

    def mm(a, b):
        return jnp.dot(a.astype(bf), b.astype(bf), preferred_element_type=f32)

    x = (params["word_emb"][input_ids]
         + params["pos_emb"][jnp.arange(S)][None]
         + params["type_emb"][token_type_ids])
    x = _ln(x, params["emb_ln_g"], params["emb_ln_b"])
    bias = (1.0 - attention_mask.astype(f32)) * (-1e9)
    for lp in params["layers"]:
        qkv = mm(x, lp["wqkv"]) + lp["bqkv"]
        q, k, v = jnp.split(qkv, 3, axis=-1)

        def heads(z):
            return z.reshape(B, S, nH, dh).transpose(0, 2, 1, 3)

        q, k, v = heads(q * (1.0 / float(dh) ** 0.5)), heads(k), heads(v)
        s = jnp.einsum("bhqd,bhkd->bhqk", q.astype(bf), k.astype(bf),
                       preferred_element_type=f32)
        p = jax.nn.softmax(s + bias[:, None, None, :], axis=-1)
        ctx = jnp.einsum("bhqk,bhkd->bhqd", p.astype(bf), v.astype(bf),
                         preferred_element_type=f32)
        ctx = ctx.transpose(0, 2, 1, 3).reshape(B, S, H)
        attn = mm(ctx, lp["wo"]) + lp["bo"]
        h1 = _ln(x + attn, lp["ln1_g"], lp["ln1_b"])
        ffn = jax.nn.gelu(mm(h1, lp["w1"]) + lp["b1"])
        ffn = mm(ffn, lp["w2"]) + lp["b2"]
        x = _ln(h1 + ffn, lp["ln2_g"], lp["ln2_b"])

    pooled = jnp.tanh(mm(x[:, 0], params["pool_w"]) + params["pool_b"])
    state_out = jnp.take_along_axis(x, state_positions[:, :, None], axis=1)
    state_scores = mm(state_out, params["action_w"]) + params["action_b"]
    domain = mm(pooled, params["domain_w"]) + params["domain_b"]
    return x, pooled, state_scores, domain


# ----------------------------------------------------------------------------
# Main
# ----------------------------------------------------------------------------
if __name__ == "__main__":
    key = jax.random.PRNGKey(0)
    B, S, J = 2, 8, 3
    n_op, n_domain, update_id = 4, 5, 1

    k_par, k_ids, _ = jax.random.split(key, 3)
    params = init_params(k_par, n_op, n_domain)

    input_ids = jax.random.randint(k_ids, (B, S), 0, CFG["vocab"], jnp.int32)
    token_type_ids = jnp.zeros((B, S), jnp.int32)
    attention_mask = jnp.ones((B, S), jnp.int32)
    state_positions = jnp.array([[1, 3, 5], [0, 2, 6]], jnp.int32)

    outs = encoder_forward(
        params, input_ids, token_type_ids, state_positions, attention_mask,
        op_ids=None, max_update=None,
        n_op=n_op, n_domain=n_domain, update_id=update_id, exclude_domain=False)
    jax.block_until_ready(outs)

    domain_scores, state_scores, decoder_inputs, sequence_output, pooled = outs
    assert domain_scores.shape == (B, n_domain)
    assert state_scores.shape == (B, J, n_op)
    assert decoder_inputs.shape == (B, J, CFG["hidden"])
    assert sequence_output.shape == (B, S, CFG["hidden"])
    assert pooled.shape == (1, B, CFG["hidden"])

    # Numerical sanity check against a pure-JAX reference of the same math.
    seq_ref, pooled_ref, st_ref, dom_ref = _ref_forward(
        params, input_ids, token_type_ids, attention_mask, state_positions)
    assert jnp.allclose(sequence_output, seq_ref, atol=2e-3, rtol=2e-3)
    assert jnp.allclose(pooled[0], pooled_ref, atol=2e-3, rtol=2e-3)
    assert jnp.allclose(state_scores, st_ref, atol=2e-3, rtol=2e-3)
    assert jnp.allclose(domain_scores, dom_ref, atol=2e-3, rtol=2e-3)

    print("KERNEL_OK")
</pallas_src>

<mosaic_0001>
module attributes {stable_mosaic.version = 11 : i64} {
  func.func @_encoder_kernel(%arg0: memref<16x32xf32, #tpu.memory_space<vmem>>, %arg1: memref<2x8xf32, #tpu.memory_space<vmem>>, %arg2: memref<8x16xf32, #tpu.memory_space<vmem>>, %arg3: memref<1x32xf32, #tpu.memory_space<vmem>>, %arg4: memref<1x32xf32, #tpu.memory_space<vmem>>, %arg5: memref<32x96xf32, #tpu.memory_space<vmem>>, %arg6: memref<1x96xf32, #tpu.memory_space<vmem>>, %arg7: memref<32x32xf32, #tpu.memory_space<vmem>>, %arg8: memref<1x32xf32, #tpu.memory_space<vmem>>, %arg9: memref<1x32xf32, #tpu.memory_space<vmem>>, %arg10: memref<1x32xf32, #tpu.memory_space<vmem>>, %arg11: memref<32x64xf32, #tpu.memory_space<vmem>>, %arg12: memref<1x64xf32, #tpu.memory_space<vmem>>, %arg13: memref<64x32xf32, #tpu.memory_space<vmem>>, %arg14: memref<1x32xf32, #tpu.memory_space<vmem>>, %arg15: memref<1x32xf32, #tpu.memory_space<vmem>>, %arg16: memref<1x32xf32, #tpu.memory_space<vmem>>, %arg17: memref<32x32xf32, #tpu.memory_space<vmem>>, %arg18: memref<1x32xf32, #tpu.memory_space<vmem>>, %arg19: memref<32x4xf32, #tpu.memory_space<vmem>>, %arg20: memref<1x4xf32, #tpu.memory_space<vmem>>, %arg21: memref<32x5xf32, #tpu.memory_space<vmem>>, %arg22: memref<1x5xf32, #tpu.memory_space<vmem>>, %arg23: memref<16x128xf32, #tpu.memory_space<vmem>>, %arg24: memref<8x128xf32, #tpu.memory_space<vmem>>) attributes {dimension_semantics = [], scalar_prefetch = 0 : i64, scratch_operands = 0 : i64, tpu.core_type = #tpu.core_type<tc>} {
    %c0 = arith.constant 0 : index
    %c0_0 = arith.constant 0 : index
    %0 = vector.load %arg0[%c0, %c0_0] : memref<16x32xf32, #tpu.memory_space<vmem>>, vector<16x32xf32>
    %c0_1 = arith.constant 0 : index
    %c0_2 = arith.constant 0 : index
    %1 = vector.load %arg3[%c0_1, %c0_2] : memref<1x32xf32, #tpu.memory_space<vmem>>, vector<1x32xf32>
    %c0_3 = arith.constant 0 : index
    %c0_4 = arith.constant 0 : index
    %2 = vector.load %arg4[%c0_3, %c0_4] : memref<1x32xf32, #tpu.memory_space<vmem>>, vector<1x32xf32>
    %cst = arith.constant dense<0.000000e+00> : vector<16xf32>
    %3 = vector.multi_reduction <add>, %0, %cst [1] : vector<16x32xf32> to vector<16xf32>
    %4 = vector.shape_cast %3 : vector<16xf32> to vector<16x1xf32>
    %cst_5 = arith.constant 3.200000e+01 : f32
    %5 = vector.broadcast %cst_5 : f32 to vector<16x1xf32>
    %6 = arith.divf %4, %5 : vector<16x1xf32>
    %7 = vector.broadcast %6 : vector<16x1xf32> to vector<16x32xf32>
    %8 = arith.subf %0, %7 : vector<16x32xf32>
    %9 = arith.mulf %8, %8 : vector<16x32xf32>
    %cst_6 = arith.constant dense<0.000000e+00> : vector<16xf32>
    %10 = vector.multi_reduction <add>, %9, %cst_6 [1] : vector<16x32xf32> to vector<16xf32>
    %11 = vector.shape_cast %10 : vector<16xf32> to vector<16x1xf32>
    %cst_7 = arith.constant 3.200000e+01 : f32
    %12 = vector.broadcast %cst_7 : f32 to vector<16x1xf32>
    %13 = arith.divf %11, %12 : vector<16x1xf32>
    %14 = vector.broadcast %6 : vector<16x1xf32> to vector<16x32xf32>
    %15 = arith.subf %0, %14 : vector<16x32xf32>
    %cst_8 = arith.constant 9.99999996E-13 : f32
    %16 = vector.broadcast %cst_8 : f32 to vector<16x1xf32>
    %17 = arith.addf %13, %16 : vector<16x1xf32>
    %18 = math.rsqrt %17 : vector<16x1xf32>
    %19 = vector.broadcast %18 : vector<16x1xf32> to vector<16x32xf32>
    %20 = arith.mulf %15, %19 : vector<16x32xf32>
    %21 = vector.broadcast %1 : vector<1x32xf32> to vector<16x32xf32>
    %22 = arith.mulf %20, %21 : vector<16x32xf32>
    %23 = vector.broadcast %2 : vector<1x32xf32> to vector<16x32xf32>
    %24 = arith.addf %22, %23 : vector<16x32xf32>
    %c0_9 = arith.constant 0 : index
    %c0_10 = arith.constant 0 : index
    %25 = vector.load %arg1[%c0_9, %c0_10] : memref<2x8xf32, #tpu.memory_space<vmem>>, vector<2x8xf32>
    %c0_11 = arith.constant 0 : index
    %c0_12 = arith.constant 0 : index
    %26 = vector.load %arg5[%c0_11, %c0_12] : memref<32x96xf32, #tpu.memory_space<vmem>>, vector<32x96xf32>
    %c0_13 = arith.constant 0 : index
    %c0_14 = arith.constant 0 : index
    %27 = vector.load %arg6[%c0_13, %c0_14] : memref<1x96xf32, #tpu.memory_space<vmem>>, vector<1x96xf32>
    %c0_15 = arith.constant 0 : index
    %c0_16 = arith.constant 0 : index
    %28 = vector.load %arg7[%c0_15, %c0_16] : memref<32x32xf32, #tpu.memory_space<vmem>>, vector<32x32xf32>
    %c0_17 = arith.constant 0 : index
    %c0_18 = arith.constant 0 : index
    %29 = vector.load %arg8[%c0_17, %c0_18] : memref<1x32xf32, #tpu.memory_space<vmem>>, vector<1x32xf32>
    %c0_19 = arith.constant 0 : index
    %c0_20 = arith.constant 0 : index
    %30 = vector.load %arg9[%c0_19, %c0_20] : memref<1x32xf32, #tpu.memory_space<vmem>>, vector<1x32xf32>
    %c0_21 = arith.constant 0 : index
    %c0_22 = arith.constant 0 : index
    %31 = vector.load %arg10[%c0_21, %c0_22] : memref<1x32xf32, #tpu.memory_space<vmem>>, vector<1x32xf32>
    %c0_23 = arith.constant 0 : index
    %c0_24 = arith.constant 0 : index
    %32 = vector.load %arg11[%c0_23, %c0_24] : memref<32x64xf32, #tpu.memory_space<vmem>>, vector<32x64xf32>
    %c0_25 = arith.constant 0 : index
    %c0_26 = arith.constant 0 : index
    %33 = vector.load %arg12[%c0_25, %c0_26] : memref<1x64xf32, #tpu.memory_space<vmem>>, vector<1x64xf32>
    %c0_27 = arith.constant 0 : index
    %c0_28 = arith.constant 0 : index
    %34 = vector.load %arg13[%c0_27, %c0_28] : memref<64x32xf32, #tpu.memory_space<vmem>>, vector<64x32xf32>
    %c0_29 = arith.constant 0 : index
    %c0_30 = arith.constant 0 : index
    %35 = vector.load %arg14[%c0_29, %c0_30] : memref<1x32xf32, #tpu.memory_space<vmem>>, vector<1x32xf32>
    %c0_31 = arith.constant 0 : index
    %c0_32 = arith.constant 0 : index
    %36 = vector.load %arg15[%c0_31, %c0_32] : memref<1x32xf32, #tpu.memory_space<vmem>>, vector<1x32xf32>
    %c0_33 = arith.constant 0 : index
    %c0_34 = arith.constant 0 : index
    %37 = vector.load %arg16[%c0_33, %c0_34] : memref<1x32xf32, #tpu.memory_space<vmem>>, vector<1x32xf32>
    %38 = arith.truncf %24 : vector<16x32xf32> to vector<16x32xbf16>
    %39 = arith.truncf %26 : vector<32x96xf32> to vector<32x96xbf16>
    %cst_35 = arith.constant dense<0.000000e+00> : vector<16x96xf32>
    %40 = tpu.matmul %38, %39, %cst_35 {dimension_numbers = #tpu.dot_dimension_numbers<[1], [0], [0], [1], [0, 0, 1, 1], [], []>} : vector<16x32xbf16>, vector<32x96xbf16>, vector<16x96xf32> -> vector<16x96xf32>
    %41 = vector.broadcast %27 : vector<1x96xf32> to vector<16x96xf32>
    %42 = arith.addf %40, %41 : vector<16x96xf32>
    %43 = vector.extract_strided_slice %42 {offsets = [0, 0], sizes = [16, 32], strides = [1, 1]} : vector<16x96xf32> to vector<16x32xf32>
    %cst_36 = arith.constant 2.500000e-01 : f32
    %44 = vector.broadcast %cst_36 : f32 to vector<16x32xf32>
    %45 = arith.mulf %43, %44 : vector<16x32xf32>
    %46 = vector.extract_strided_slice %42 {offsets = [0, 32], sizes = [16, 32], strides = [1, 1]} : vector<16x96xf32> to vector<16x32xf32>
    %47 = vector.extract_strided_slice %42 {offsets = [0, 64], sizes = [16, 32], strides = [1, 1]} : vector<16x96xf32> to vector<16x32xf32>
    %48 = vector.extract_strided_slice %45 {offsets = [0, 0], sizes = [16, 16], strides = [1, 1]} : vector<16x32xf32> to vector<16x16xf32>
    %49 = vector.shape_cast %48 : vector<16x16xf32> to vector<2x8x16xf32>
    %50 = vector.extract_strided_slice %45 {offsets = [0, 16], sizes = [16, 16], strides = [1, 1]} : vector<16x32xf32> to vector<16x16xf32>
    %51 = vector.shape_cast %50 : vector<16x16xf32> to vector<2x8x16xf32>
    %52 = tpu.concatenate %49, %51 in 0 : vector<2x8x16xf32>, vector<2x8x16xf32> -> vector<4x8x16xf32>
    %53 = vector.extract_strided_slice %46 {offsets = [0, 0], sizes = [16, 16], strides = [1, 1]} : vector<16x32xf32> to vector<16x16xf32>
    %54 = vector.shape_cast %53 : vector<16x16xf32> to vector<2x8x16xf32>
    %55 = vector.extract_strided_slice %46 {offsets = [0, 16], sizes = [16, 16], strides = [1, 1]} : vector<16x32xf32> to vector<16x16xf32>
    %56 = vector.shape_cast %55 : vector<16x16xf32> to vector<2x8x16xf32>
    %57 = tpu.concatenate %54, %56 in 0 : vector<2x8x16xf32>, vector<2x8x16xf32> -> vector<4x8x16xf32>
    %58 = vector.extract_strided_slice %47 {offsets = [0, 0], sizes = [16, 16], strides = [1, 1]} : vector<16x32xf32> to vector<16x16xf32>
    %59 = vector.shape_cast %58 : vector<16x16xf32> to vector<2x8x16xf32>
    %60 = vector.extract_strided_slice %47 {offsets = [0, 16], sizes = [16, 16], strides = [1, 1]} : vector<16x32xf32> to vector<16x16xf32>
    %61 = vector.shape_cast %60 : vector<16x16xf32> to vector<2x8x16xf32>
    %62 = tpu.concatenate %59, %61 in 0 : vector<2x8x16xf32>, vector<2x8x16xf32> -> vector<4x8x16xf32>
    %63 = arith.truncf %52 : vector<4x8x16xf32> to vector<4x8x16xbf16>
    %64 = arith.truncf %57 : vector<4x8x16xf32> to vector<4x8x16xbf16>
    "tpu.trace_start"() <{level = 10 : i32, message = "bqd,bkd->bqk"}> : () -> ()
    %cst_37 = arith.constant dense<0.000000e+00> : vector<4x8x8xf32>
    %65 = tpu.matmul %63, %64, %cst_37 {dimension_numbers = #tpu.dot_dimension_numbers<[2], [2], [1], [1], [0, 0, 0, 1, 1, 1], [0], [0]>} : vector<4x8x16xbf16>, vector<4x8x16xbf16>, vector<4x8x8xf32> -> vector<4x8x8xf32>
    "tpu.trace_stop"() : () -> ()
    %66 = tpu.concatenate %25, %25 in 0 : vector<2x8xf32>, vector<2x8xf32> -> vector<4x8xf32>
    %67 = vector.shape_cast %66 : vector<4x8xf32> to vector<4x1x8xf32>
    %68 = vector.broadcast %67 : vector<4x1x8xf32> to vector<4x8x8xf32>
    %69 = arith.addf %65, %68 : vector<4x8x8xf32>
    %cst_38 = arith.constant dense<0xFF800000> : vector<4x8xf32>
    %70 = vector.multi_reduction <maximumf>, %69, %cst_38 [2] : vector<4x8x8xf32> to vector<4x8xf32>
    %cst_39 = arith.constant 0xFF800000 : f32
    %71 = vector.broadcast %cst_39 : f32 to vector<4x8xf32>
    %72 = arith.maximumf %71, %70 : vector<4x8xf32>
    %73 = vector.shape_cast %72 : vector<4x8xf32> to vector<4x8x1xf32>
    %74 = vector.broadcast %73 : vector<4x8x1xf32> to vector<4x8x8xf32>
    %75 = arith.subf %69, %74 : vector<4x8x8xf32>
    %76 = math.exp %75 : vector<4x8x8xf32>
    %cst_40 = arith.constant dense<0.000000e+00> : vector<4x8xf32>
    %77 = vector.multi_reduction <add>, %76, %cst_40 [2] : vector<4x8x8xf32> to vector<4x8xf32>
    %78 = vector.shape_cast %77 : vector<4x8xf32> to vector<4x8x1xf32>
    %79 = vector.broadcast %78 : vector<4x8x1xf32> to vector<4x8x8xf32>
    %80 = arith.divf %76, %79 : vector<4x8x8xf32>
    %81 = arith.truncf %80 : vector<4x8x8xf32> to vector<4x8x8xbf16>
    %82 = arith.truncf %62 : vector<4x8x16xf32> to vector<4x8x16xbf16>
    "tpu.trace_start"() <{level = 10 : i32, message = "bqk,bkd->bqd"}> : () -> ()
    %cst_41 = arith.constant dense<0.000000e+00> : vector<4x8x16xf32>
    %83 = tpu.matmul %81, %82, %cst_41 {dimension_numbers = #tpu.dot_dimension_numbers<[2], [1], [1], [2], [0, 0, 0, 1, 1, 2], [0], [0]>} : vector<4x8x8xbf16>, vector<4x8x16xbf16>, vector<4x8x16xf32> -> vector<4x8x16xf32>
    "tpu.trace_stop"() : () -> ()
    %84 = vector.extract_strided_slice %83 {offsets = [0, 0, 0], sizes = [2, 8, 16], strides = [1, 1, 1]} : vector<4x8x16xf32> to vector<2x8x16xf32>
    %85 = vector.shape_cast %84 : vector<2x8x16xf32> to vector<16x16xf32>
    %86 = vector.extract_strided_slice %83 {offsets = [2, 0, 0], sizes = [2, 8, 16], strides = [1, 1, 1]} : vector<4x8x16xf32> to vector<2x8x16xf32>
    %87 = vector.shape_cast %86 : vector<2x8x16xf32> to vector<16x16xf32>
    %88 = tpu.concatenate %85, %87 in 1 : vector<16x16xf32>, vector<16x16xf32> -> vector<16x32xf32>
    %89 = arith.truncf %88 : vector<16x32xf32> to vector<16x32xbf16>
    %90 = arith.truncf %28 : vector<32x32xf32> to vector<32x32xbf16>
    %cst_42 = arith.constant dense<0.000000e+00> : vector<16x32xf32>
    %91 = tpu.matmul %89, %90, %cst_42 {dimension_numbers = #tpu.dot_dimension_numbers<[1], [0], [0], [1], [0, 0, 1, 1], [], []>} : vector<16x32xbf16>, vector<32x32xbf16>, vector<16x32xf32> -> vector<16x32xf32>
    %92 = vector.broadcast %29 : vector<1x32xf32> to vector<16x32xf32>
    %93 = arith.addf %91, %92 : vector<16x32xf32>
    %94 = arith.addf %24, %93 : vector<16x32xf32>
    %cst_43 = arith.constant dense<0.000000e+00> : vector<16xf32>
    %95 = vector.multi_reduction <add>, %94, %cst_43 [1] : vector<16x32xf32> to vector<16xf32>
    %96 = vector.shape_cast %95 : vector<16xf32> to vector<16x1xf32>
    %cst_44 = arith.constant 3.200000e+01 : f32
    %97 = vector.broadcast %cst_44 : f32 to vector<16x1xf32>
    %98 = arith.divf %96, %97 : vector<16x1xf32>
    %99 = vector.broadcast %98 : vector<16x1xf32> to vector<16x32xf32>
    %100 = arith.subf %94, %99 : vector<16x32xf32>
    %101 = arith.mulf %100, %100 : vector<16x32xf32>
    %cst_45 = arith.constant dense<0.000000e+00> : vector<16xf32>
    %102 = vector.multi_reduction <add>, %101, %cst_45 [1] : vector<16x32xf32> to vector<16xf32>
    %103 = vector.shape_cast %102 : vector<16xf32> to vector<16x1xf32>
    %cst_46 = arith.constant 3.200000e+01 : f32
    %104 = vector.broadcast %cst_46 : f32 to vector<16x1xf32>
    %105 = arith.divf %103, %104 : vector<16x1xf32>
    %106 = vector.broadcast %98 : vector<16x1xf32> to vector<16x32xf32>
    %107 = arith.subf %94, %106 : vector<16x32xf32>
    %cst_47 = arith.constant 9.99999996E-13 : f32
    %108 = vector.broadcast %cst_47 : f32 to vector<16x1xf32>
    %109 = arith.addf %105, %108 : vector<16x1xf32>
    %110 = math.rsqrt %109 : vector<16x1xf32>
    %111 = vector.broadcast %110 : vector<16x1xf32> to vector<16x32xf32>
    %112 = arith.mulf %107, %111 : vector<16x32xf32>
    %113 = vector.broadcast %30 : vector<1x32xf32> to vector<16x32xf32>
    %114 = arith.mulf %112, %113 : vector<16x32xf32>
    %115 = vector.broadcast %31 : vector<1x32xf32> to vector<16x32xf32>
    %116 = arith.addf %114, %115 : vector<16x32xf32>
    %117 = arith.truncf %116 : vector<16x32xf32> to vector<16x32xbf16>
    %118 = arith.truncf %32 : vector<32x64xf32> to vector<32x64xbf16>
    %cst_48 = arith.constant dense<0.000000e+00> : vector<16x64xf32>
    %119 = tpu.matmul %117, %118, %cst_48 {dimension_numbers = #tpu.dot_dimension_numbers<[1], [0], [0], [1], [0, 0, 1, 1], [], []>} : vector<16x32xbf16>, vector<32x64xbf16>, vector<16x64xf32> -> vector<16x64xf32>
    %120 = vector.broadcast %33 : vector<1x64xf32> to vector<16x64xf32>
    %121 = arith.addf %119, %120 : vector<16x64xf32>
    %122 = arith.mulf %121, %121 : vector<16x64xf32>
    %123 = arith.mulf %121, %122 : vector<16x64xf32>
    %cst_49 = arith.constant 4.471500e-02 : f32
    %124 = vector.broadcast %cst_49 : f32 to vector<16x64xf32>
    %125 = arith.mulf %124, %123 : vector<16x64xf32>
    %126 = arith.addf %121, %125 : vector<16x64xf32>
    %cst_50 = arith.constant 0.797884583 : f32
    %127 = vector.broadcast %cst_50 : f32 to vector<16x64xf32>
    %128 = arith.mulf %127, %126 : vector<16x64xf32>
    %129 = math.tanh %128 : vector<16x64xf32>
    %cst_51 = arith.constant 1.000000e+00 : f32
    %130 = vector.broadcast %cst_51 : f32 to vector<16x64xf32>
    %131 = arith.addf %130, %129 : vector<16x64xf32>
    %cst_52 = arith.constant 5.000000e-01 : f32
    %132 = vector.broadcast %cst_52 : f32 to vector<16x64xf32>
    %133 = arith.mulf %132, %131 : vector<16x64xf32>
    %134 = arith.mulf %121, %133 : vector<16x64xf32>
    %135 = arith.truncf %134 : vector<16x64xf32> to vector<16x64xbf16>
    %136 = arith.truncf %34 : vector<64x32xf32> to vector<64x32xbf16>
    %cst_53 = arith.constant dense<0.000000e+00> : vector<16x32xf32>
    %137 = tpu.matmul %135, %136, %cst_53 {dimension_numbers = #tpu.dot_dimension_numbers<[1], [0], [0], [1], [0, 0, 1, 1], [], []>} : vector<16x64xbf16>, vector<64x32xbf16>, vector<16x32xf32> -> vector<16x32xf32>
    %138 = vector.broadcast %35 : vector<1x32xf32> to vector<16x32xf32>
    %139 = arith.addf %137, %138 : vector<16x32xf32>
    %140 = arith.addf %116, %139 : vector<16x32xf32>
    %cst_54 = arith.constant dense<0.000000e+00> : vector<16xf32>
    %141 = vector.multi_reduction <add>, %140, %cst_54 [1] : vector<16x32xf32> to vector<16xf32>
    %142 = vector.shape_cast %141 : vector<16xf32> to vector<16x1xf32>
    %cst_55 = arith.constant 3.200000e+01 : f32
    %143 = vector.broadcast %cst_55 : f32 to vector<16x1xf32>
    %144 = arith.divf %142, %143 : vector<16x1xf32>
    %145 = vector.broadcast %144 : vector<16x1xf32> to vector<16x32xf32>
    %146 = arith.subf %140, %145 : vector<16x32xf32>
    %147 = arith.mulf %146, %146 : vector<16x32xf32>
    %cst_56 = arith.constant dense<0.000000e+00> : vector<16xf32>
    %148 = vector.multi_reduction <add>, %147, %cst_56 [1] : vector<16x32xf32> to vector<16xf32>
    %149 = vector.shape_cast %148 : vector<16xf32> to vector<16x1xf32>
    %cst_57 = arith.constant 3.200000e+01 : f32
    %150 = vector.broadcast %cst_57 : f32 to vector<16x1xf32>
    %151 = arith.divf %149, %150 : vector<16x1xf32>
    %152 = vector.broadcast %144 : vector<16x1xf32> to vector<16x32xf32>
    %153 = arith.subf %140, %152 : vector<16x32xf32>
    %cst_58 = arith.constant 9.99999996E-13 : f32
    %154 = vector.broadcast %cst_58 : f32 to vector<16x1xf32>
    %155 = arith.addf %151, %154 : vector<16x1xf32>
    %156 = math.rsqrt %155 : vector<16x1xf32>
    %157 = vector.broadcast %156 : vector<16x1xf32> to vector<16x32xf32>
    %158 = arith.mulf %153, %157 : vector<16x32xf32>
    %159 = vector.broadcast %36 : vector<1x32xf32> to vector<16x32xf32>
    %160 = arith.mulf %158, %159 : vector<16x32xf32>
    %161 = vector.broadcast %37 : vector<1x32xf32> to vector<16x32xf32>
    %162 = arith.addf %160, %161 : vector<16x32xf32>
    %cst_59 = arith.constant 0.000000e+00 : f32
    %163 = vector.broadcast %cst_59 : f32 to vector<16x96xf32>
    %164 = tpu.concatenate %162, %163 in 1 : vector<16x32xf32>, vector<16x96xf32> -> vector<16x128xf32>
    %c0_60 = arith.constant 0 : index
    %c0_61 = arith.constant 0 : index
    %165 = vector.load %arg23[%c0_60, %c0_61] : memref<16x128xf32, #tpu.memory_space<vmem>>, vector<16x128xf32>
    tpu.vector_store %arg23[%c0_60, %c0_61], %164 {strides = array<i32>} : memref<16x128xf32, #tpu.memory_space<vmem>>, vector<16x128xf32>,
    %c0_62 = arith.constant 0 : index
    %c0_63 = arith.constant 0 : index
    %166 = vector.load %arg2[%c0_62, %c0_63] : memref<8x16xf32, #tpu.memory_space<vmem>>, vector<8x16xf32>
    %cst_64 = arith.constant dense<0.000000e+00> : vector<8x32xf32>
    %167 = tpu.matmul %166, %162, %cst_64 {dimension_numbers = #tpu.dot_dimension_numbers<[1], [0], [0], [1], [0, 0, 1, 1], [], []>} : vector<8x16xf32>, vector<16x32xf32>, vector<8x32xf32> -> vector<8x32xf32>
    %168 = vector.extract_strided_slice %167 {offsets = [0, 0], sizes = [2, 32], strides = [1, 1]} : vector<8x32xf32> to vector<2x32xf32>
    %169 = vector.extract_strided_slice %167 {offsets = [2, 0], sizes = [6, 32], strides = [1, 1]} : vector<8x32xf32> to vector<6x32xf32>
    %c0_65 = arith.constant 0 : index
    %c0_66 = arith.constant 0 : index
    %170 = vector.load %arg17[%c0_65, %c0_66] : memref<32x32xf32, #tpu.memory_space<vmem>>, vector<32x32xf32>
    %171 = arith.truncf %168 : vector<2x32xf32> to vector<2x32xbf16>
    %172 = arith.truncf %170 : vector<32x32xf32> to vector<32x32xbf16>
    %cst_67 = arith.constant dense<0.000000e+00> : vector<2x32xf32>
    %173 = tpu.matmul %171, %172, %cst_67 {dimension_numbers = #tpu.dot_dimension_numbers<[1], [0], [0], [1], [0, 0, 1, 1], [], []>} : vector<2x32xbf16>, vector<32x32xbf16>, vector<2x32xf32> -> vector<2x32xf32>
    %c0_68 = arith.constant 0 : index
    %c0_69 = arith.constant 0 : index
    %174 = vector.load %arg18[%c0_68, %c0_69] : memref<1x32xf32, #tpu.memory_space<vmem>>, vector<1x32xf32>
    %175 = vector.broadcast %174 : vector<1x32xf32> to vector<2x32xf32>
    %176 = arith.addf %173, %175 : vector<2x32xf32>
    %177 = math.tanh %176 : vector<2x32xf32>
    %c0_70 = arith.constant 0 : index
    %c0_71 = arith.constant 0 : index
    %178 = vector.load %arg21[%c0_70, %c0_71] : memref<32x5xf32, #tpu.memory_space<vmem>>, vector<32x5xf32>
    %179 = arith.truncf %177 : vector<2x32xf32> to vector<2x32xbf16>
    %180 = arith.truncf %178 : vector<32x5xf32> to vector<32x5xbf16>
    %cst_72 = arith.constant dense<0.000000e+00> : vector<2x5xf32>
    %181 = tpu.matmul %179, %180, %cst_72 {dimension_numbers = #tpu.dot_dimension_numbers<[1], [0], [0], [1], [0, 0, 1, 1], [], []>} : vector<2x32xbf16>, vector<32x5xbf16>, vector<2x5xf32> -> vector<2x5xf32>
    %c0_73 = arith.constant 0 : index
    %c0_74 = arith.constant 0 : index
    %182 = vector.load %arg22[%c0_73, %c0_74] : memref<1x5xf32, #tpu.memory_space<vmem>>, vector<1x5xf32>
    %183 = vector.broadcast %182 : vector<1x5xf32> to vector<2x5xf32>
    %184 = arith.addf %181, %183 : vector<2x5xf32>
    %c0_75 = arith.constant 0 : index
    %c0_76 = arith.constant 0 : index
    %185 = vector.load %arg19[%c0_75, %c0_76] : memref<32x4xf32, #tpu.memory_space<vmem>>, vector<32x4xf32>
    %186 = arith.truncf %169 : vector<6x32xf32> to vector<6x32xbf16>
    %187 = arith.truncf %185 : vector<32x4xf32> to vector<32x4xbf16>
    %cst_77 = arith.constant dense<0.000000e+00> : vector<6x4xf32>
    %188 = tpu.matmul %186, %187, %cst_77 {dimension_numbers = #tpu.dot_dimension_numbers<[1], [0], [0], [1], [0, 0, 1, 1], [], []>} : vector<6x32xbf16>, vector<32x4xbf16>, vector<6x4xf32> -> vector<6x4xf32>
    %c0_78 = arith.constant 0 : index
    %c0_79 = arith.constant 0 : index
    %189 = vector.load %arg20[%c0_78, %c0_79] : memref<1x4xf32, #tpu.memory_space<vmem>>, vector<1x4xf32>
    %190 = vector.broadcast %189 : vector<1x4xf32> to vector<6x4xf32>
    %191 = arith.addf %188, %190 : vector<6x4xf32>
    %cst_80 = arith.constant 0.000000e+00 : f32
    %192 = vector.broadcast %cst_80 : f32 to vector<2x91xf32>
    %193 = tpu.concatenate %177, %184, %192 in 1 : vector<2x32xf32>, vector<2x5xf32>, vector<2x91xf32> -> vector<2x128xf32>
    %cst_81 = arith.constant 0.000000e+00 : f32
    %194 = vector.broadcast %cst_81 : f32 to vector<6x92xf32>
    %195 = tpu.concatenate %169, %191, %194 in 1 : vector<6x32xf32>, vector<6x4xf32>, vector<6x92xf32> -> vector<6x128xf32>
    %196 = tpu.concatenate %193, %195 in 0 : vector<2x128xf32>, vector<6x128xf32> -> vector<8x128xf32>
    %c0_82 = arith.constant 0 : index
    %c0_83 = arith.constant 0 : index
    %197 = vector.load %arg24[%c0_82, %c0_83] : memref<8x128xf32, #tpu.memory_space<vmem>>, vector<8x128xf32>
    tpu.vector_store %arg24[%c0_82, %c0_83], %196 {strides = array<i32>} : memref<8x128xf32, #tpu.memory_space<vmem>>, vector<8x128xf32>,
    return
  }
}

</mosaic_0001>

<llo_original>
// kernel: tpu_custom_call.1
$region0: #{tpu_custom_call.1}
  #allocation0 [shape = 'u32[]', space=smem, size = 0x4, offset = 0x4, fixed_abs, tag = 'smem constant byte address 0x4 - core index']
  #allocation1 [shape = 'u32[144,128]{1,0:T(1,128)}', space=vmem, size = 0x12000, scoped, tag = 'internal scratch']
  %s0 = inlined_call_operand.hbm [shape: f32[16,32], index: 0, kind: input, shape index: {}]
  %s1 = inlined_call_operand.vmem [shape: f32[2,8], index: 1, kind: input, shape index: {}]
  %s2 = inlined_call_operand.vmem [shape: f32[8,16], index: 2, kind: input, shape index: {}]
  %s3 = inlined_call_operand.vmem [shape: f32[1,32], index: 3, kind: input, shape index: {}]
  %s4 = inlined_call_operand.vmem [shape: f32[1,32], index: 4, kind: input, shape index: {}]
  %s5 = inlined_call_operand.vmem [shape: f32[32,96], index: 5, kind: input, shape index: {}]
  %s6 = inlined_call_operand.vmem [shape: f32[1,96], index: 6, kind: input, shape index: {}]
  %s7 = inlined_call_operand.vmem [shape: f32[32,32], index: 7, kind: input, shape index: {}]
  %s8 = inlined_call_operand.vmem [shape: f32[1,32], index: 8, kind: input, shape index: {}]
  %s9 = inlined_call_operand.vmem [shape: f32[1,32], index: 9, kind: input, shape index: {}]
  %s10 = inlined_call_operand.vmem [shape: f32[1,32], index: 10, kind: input, shape index: {}]
  %s11 = inlined_call_operand.vmem [shape: f32[32,64], index: 11, kind: input, shape index: {}]
  %s12 = inlined_call_operand.vmem [shape: f32[1,64], index: 12, kind: input, shape index: {}]
  %s13 = inlined_call_operand.vmem [shape: f32[64,32], index: 13, kind: input, shape index: {}]
  %s14 = inlined_call_operand.vmem [shape: f32[1,32], index: 14, kind: input, shape index: {}]
  %s15 = inlined_call_operand.vmem [shape: f32[1,32], index: 15, kind: input, shape index: {}]
  %s16 = inlined_call_operand.vmem [shape: f32[1,32], index: 16, kind: input, shape index: {}]
  %s17 = inlined_call_operand.vmem [shape: f32[32,32], index: 17, kind: input, shape index: {}]
  %s18 = inlined_call_operand.vmem [shape: f32[1,32], index: 18, kind: input, shape index: {}]
  %s19 = inlined_call_operand.vmem [shape: f32[32,4], index: 19, kind: input, shape index: {}]
  %s20 = inlined_call_operand.vmem [shape: f32[1,4], index: 20, kind: input, shape index: {}]
  %s21 = inlined_call_operand.vmem [shape: f32[32,5], index: 21, kind: input, shape index: {}]
  %s22 = inlined_call_operand.vmem [shape: f32[1,5], index: 22, kind: input, shape index: {}]
  %s23 = inlined_call_operand.hbm [shape: f32[16,128], index: 23, kind: output, shape index: {0}]
  %s24 = inlined_call_operand.hbm [shape: f32[8,128], index: 24, kind: output, shape index: {1}]
  %25 = xla_tuple %s23, %s24
  %s26 = sld [smem:[#allocation0]]
  $region114: #{tpu_custom_call.1} parent=0
    _
  %s28 = ssub.s32 1, %s26
  %s29 = scalar_select 0, %s28, %s26
  $region1: #{tpu_custom_call.1} parent=0
    #allocation2 [shape = 'u8[8192]{0}', space=vmem, size = 0x2000, scoped, tag = 'input window, operand 0, single buffered']
    #allocation3 [shape = 's32[1]{0}', space=sflag, size = 0x4, scoped, tag = 'scoped memory for tpu_custom_call.1']
    #allocation4 [shape = 's32[1]{0}', space=sflag, size = 0x4, scoped, tag = 'scoped memory for tpu_custom_call.1']
    #allocation5 [shape = 'u8[8192]{0}', space=vmem, size = 0x2000, scoped, tag = 'output window, operand 0, single buffered']
    #allocation6 [shape = 'u8[4096]{0}', space=vmem, size = 0x1000, scoped, tag = 'output window, operand 1, single buffered']
    #allocation7 [shape = 's32[1]{0}', space=sflag, size = 0x4, scoped, tag = 'scoped memory for tpu_custom_call.1']
    %30 = vsyncpa [#allocation3], 0
    %31 = vsyncpa [#allocation4], 0
    %32 = vsyncpa [#allocation7], 0
    // Predicated region
    $region2: #{tpu_custom_call.1} parent=1 // pred_check
      _
    $region3: #{tpu_custom_call.1} parent=1 // pred_check_branch
      %34 = sbr.rel (0) target = $region5
    $region4: #{tpu_custom_call.1} parent=1 // pred_region
      %s36 = ssub.s32 256, 256
      %37 = vsyncadd [#allocation3], %s36
      %s38 = sshll.u32 [#allocation2], 4
      %s39 = int_to_ptr.vmem [resolvable:$true] %s38
      %44 = dma.hbm_to_vmem [thread:$0]  %s0, 256, %s39, [#allocation3], 128, 128, 8
    $region5: #{tpu_custom_call.1} parent=1 // pred_fallthru
      _
    // Predicated region
    $region6: #{tpu_custom_call.1} parent=1 // pred_check
      _
    $region7: #{tpu_custom_call.1} parent=1 // pred_check_branch
      %46 = sbr.rel (0) target = $region9
    $region8: #{tpu_custom_call.1} parent=1 // pred_region
      _
    $region9: #{tpu_custom_call.1} parent=1 // pred_fallthru
      _
    // Predicated region
    $region10: #{tpu_custom_call.1} parent=1 // pred_check
      _
    $region11: #{tpu_custom_call.1} parent=1 // pred_check_branch
      %48 = sbr.rel (0) target = $region13
    $region12: #{tpu_custom_call.1} parent=1 // pred_region
      _
    $region13: #{tpu_custom_call.1} parent=1 // pred_fallthru
      _
    // Predicated region
    $region14: #{tpu_custom_call.1} parent=1 // pred_check
      _
    $region15: #{tpu_custom_call.1} parent=1 // pred_check_branch
      %50 = sbr.rel (0) target = $region17
    $region16: #{tpu_custom_call.1} parent=1 // pred_region
      _
    $region17: #{tpu_custom_call.1} parent=1 // pred_fallthru
      _
    // Predicated region
    $region18: #{tpu_custom_call.1} parent=1 // pred_check
      _
    $region19: #{tpu_custom_call.1} parent=1 // pred_check_branch
      %52 = sbr.rel (0) target = $region21
    $region20: #{tpu_custom_call.1} parent=1 // pred_region
      _
    $region21: #{tpu_custom_call.1} parent=1 // pred_fallthru
      _
    // Predicated region
    $region22: #{tpu_custom_call.1} parent=1 // pred_check
      _
    $region23: #{tpu_custom_call.1} parent=1 // pred_check_branch
      %54 = sbr.rel (0) target = $region25
    $region24: #{tpu_custom_call.1} parent=1 // pred_region
      _
    $region25: #{tpu_custom_call.1} parent=1 // pred_fallthru
      _
    // Predicated region
    $region26: #{tpu_custom_call.1} parent=1 // pred_check
      _
    $region27: #{tpu_custom_call.1} parent=1 // pred_check_branch
      %56 = sbr.rel (0) target = $region29
    $region28: #{tpu_custom_call.1} parent=1 // pred_region
      _
    $region29: #{tpu_custom_call.1} parent=1 // pred_fallthru
      _
    // Predicated region
    $region30: #{tpu_custom_call.1} parent=1 // pred_check
      _
    $region31: #{tpu_custom_call.1} parent=1 // pred_check_branch
      %58 = sbr.rel (0) target = $region33
    $region32: #{tpu_custom_call.1} parent=1 // pred_region
      _
    $region33: #{tpu_custom_call.1} parent=1 // pred_fallthru
      _
    // Predicated region
    $region34: #{tpu_custom_call.1} parent=1 // pred_check
      _
    $region35: #{tpu_custom_call.1} parent=1 // pred_check_branch
      %60 = sbr.rel (0) target = $region37
    $region36: #{tpu_custom_call.1} parent=1 // pred_region
      _
    $region37: #{tpu_custom_call.1} parent=1 // pred_fallthru
      _
    // Predicated region
    $region38: #{tpu_custom_call.1} parent=1 // pred_check
      _
    $region39: #{tpu_custom_call.1} parent=1 // pred_check_branch
      %62 = sbr.rel (0) target = $region41
    $region40: #{tpu_custom_call.1} parent=1 // pred_region
      _
    $region41: #{tpu_custom_call.1} parent=1 // pred_fallthru
      _
    // Predicated region
    $region42: #{tpu_custom_call.1} parent=1 // pred_check
      _
    $region43: #{tpu_custom_call.1} parent=1 // pred_check_branch
      %64 = sbr.rel (0) target = $region45
    $region44: #{tpu_custom_call.1} parent=1 // pred_region
      _
    $region45: #{tpu_custom_call.1} parent=1 // pred_fallthru
      _
    // Predicated region
    $region46: #{tpu_custom_call.1} parent=1 // pred_check
      _
    $region47: #{tpu_custom_call.1} parent=1 // pred_check_branch
      %66 = sbr.rel (0) target = $region49
    $region48: #{tpu_custom_call.1} parent=1 // pred_region
      _
    $region49: #{tpu_custom_call.1} parent=1 // pred_fallthru
      _
    // Predicated region
    $region50: #{tpu_custom_call.1} parent=1 // pred_check
      _
    $region51: #{tpu_custom_call.1} parent=1 // pred_check_branch
      %68 = sbr.rel (0) target = $region53
    $region52: #{tpu_custom_call.1} parent=1 // pred_region
      _
    $region53: #{tpu_custom_call.1} parent=1 // pred_fallthru
      _
    // Predicated region
    $region54: #{tpu_custom_call.1} parent=1 // pred_check
      _
    $region55: #{tpu_custom_call.1} parent=1 // pred_check_branch
      %70 = sbr.rel (0) target = $region57
    $region56: #{tpu_custom_call.1} parent=1 // pred_region
      _
    $region57: #{tpu_custom_call.1} parent=1 // pred_fallthru
      _
    // Predicated region
    $region58: #{tpu_custom_call.1} parent=1 // pred_check
      _
    $region59: #{tpu_custom_call.1} parent=1 // pred_check_branch
      %72 = sbr.rel (0) target = $region61
    $region60: #{tpu_custom_call.1} parent=1 // pred_region
      _
    $region61: #{tpu_custom_call.1} parent=1 // pred_fallthru
      _
    // Predicated region
    $region62: #{tpu_custom_call.1} parent=1 // pred_check
      _
    $region63: #{tpu_custom_call.1} parent=1 // pred_check_branch
      %74 = sbr.rel (0) target = $region65
    $region64: #{tpu_custom_call.1} parent=1 // pred_region
      _
    $region65: #{tpu_custom_call.1} parent=1 // pred_fallthru
      _
    // Predicated region
    $region66: #{tpu_custom_call.1} parent=1 // pred_check
      _
    $region67: #{tpu_custom_call.1} parent=1 // pred_check_branch
      %76 = sbr.rel (0) target = $region69
    $region68: #{tpu_custom_call.1} parent=1 // pred_region
      _
    $region69: #{tpu_custom_call.1} parent=1 // pred_fallthru
      _
    // Predicated region
    $region70: #{tpu_custom_call.1} parent=1 // pred_check
      _
    $region71: #{tpu_custom_call.1} parent=1 // pred_check_branch
      %78 = sbr.rel (0) target = $region73
    $region72: #{tpu_custom_call.1} parent=1 // pred_region
      _
    $region73: #{tpu_custom_call.1} parent=1 // pred_fallthru
      _
    // Predicated region
    $region74: #{tpu_custom_call.1} parent=1 // pred_check
      _
    $region75: #{tpu_custom_call.1} parent=1 // pred_check_branch
      %80 = sbr.rel (0) target = $region77
    $region76: #{tpu_custom_call.1} parent=1 // pred_region
      _
    $region77: #{tpu_custom_call.1} parent=1 // pred_fallthru
      _
    // Predicated region
    $region78: #{tpu_custom_call.1} parent=1 // pred_check
      _
    $region79: #{tpu_custom_call.1} parent=1 // pred_check_branch
      %82 = sbr.rel (0) target = $region81
    $region80: #{tpu_custom_call.1} parent=1 // pred_region
      _
    $region81: #{tpu_custom_call.1} parent=1 // pred_fallthru
      _
    // Predicated region
    $region82: #{tpu_custom_call.1} parent=1 // pred_check
      _
    $region83: #{tpu_custom_call.1} parent=1 // pred_check_branch
      %84 = sbr.rel (0) target = $region85
    $region84: #{tpu_custom_call.1} parent=1 // pred_region
      _
    $region85: #{tpu_custom_call.1} parent=1 // pred_fallthru
      _
    // Predicated region
    $region86: #{tpu_custom_call.1} parent=1 // pred_check
      _
    $region87: #{tpu_custom_call.1} parent=1 // pred_check_branch
      %86 = sbr.rel (0) target = $region89
    $region88: #{tpu_custom_call.1} parent=1 // pred_region
      _
    $region89: #{tpu_custom_call.1} parent=1 // pred_fallthru
      _
    // Predicated region
    $region90: #{tpu_custom_call.1} parent=1 // pred_check
      _
    $region91: #{tpu_custom_call.1} parent=1 // pred_check_branch
      %88 = sbr.rel (0) target = $region93
    $region92: #{tpu_custom_call.1} parent=1 // pred_region
      _
    $region93: #{tpu_custom_call.1} parent=1 // pred_fallthru
      _
    // Predicated region
    $region94: #{tpu_custom_call.1} parent=1 // pred_check
      _
    $region95: #{tpu_custom_call.1} parent=1 // pred_check_branch
      %90 = sbr.rel (0) target = $region97
    $region96: #{tpu_custom_call.1} parent=1 // pred_region
      %91 = dma.done [#allocation3], 256
    $region97: #{tpu_custom_call.1} parent=1 // pred_fallthru
      _
    %v93 = vld [vmem:[#allocation2] sm:$0xff]
    %v94 = vld [vmem:[#allocation2 + $0x8] sm:$0xff]
    %v95 = vld [vmem:[%s3] sm:$0x1]
    %v96 = vld [vmem:[%s4] sm:$0x1]
    %vm97 = vcmask 261120
    %v98 = vsel %vm97, %v93, 0.0
    %99 = vadd.xlane.f32.xlu0 %v98
    %v100 = vpop.xlane.xlu0 %99
    %v101 = vsel %vm97, %v94, 0.0
    %102 = vadd.xlane.f32.xlu0 %v101
    %v103 = vpop.xlane.xlu0 %102
    %v104 = vrcp.pop 32.0
    %v105 = vmul.f32 %v100, %v104
    %v106 = vmul.f32 %v103, %v104
    %v107 = vsub.f32 %v93, %v105
    %v108 = vsub.f32 %v94, %v106
    %v109 = vmul.f32 %v107, %v107
    %v110 = vmul.f32 %v108, %v108
    %v111 = vsel %vm97, %v109, 0.0
    %112 = vadd.xlane.f32.xlu0 %v111
    %v113 = vpop.xlane.xlu0 %112
    %v114 = vsel %vm97, %v110, 0.0
    %115 = vadd.xlane.f32.xlu0 %v114
    %v116 = vpop.xlane.xlu0 %115
    %v117 = vmul.f32 %v113, %v104
    %v118 = vmul.f32 %v116, %v104
    %v119 = vadd.f32 %v117, 1e-12
    %v120 = vadd.f32 %v118, 1e-12
    %v121 = vrsqrt.pop %v119
    %v122 = vrsqrt.pop %v120
    %v123 = vmul.f32 %v107, %v121
    %v124 = vmul.f32 %v108, %v122
    %v126 = vlaneseq
    %v127 = vshrl.u32 %v126, 7
    %v128 = vsub.s32 0, %v127
    %v129 = vrot.slane %v95, %v128
    %v131 = vmul.f32 %v123, %v129
    %v132 = vmul.f32 %v124, %v129
    %v134 = vlaneseq
    %v135 = vshrl.u32 %v134, 7
    %v136 = vsub.s32 0, %v135
    %v137 = vrot.slane %v96, %v136
    %v139 = vadd.f32 %v131, %v137
    %v140 = vadd.f32 %v132, %v137
    %v141 = vld [vmem:[%s1] sm:$0x3]
    %v142 = vld [vmem:[%s5] sm:$0xff]
    %v143 = vld [vmem:[%s5 + $0x8] sm:$0xff]
    %v144 = vld [vmem:[%s5 + $0x10] sm:$0xff]
    %v145 = vld [vmem:[%s5 + $0x18] sm:$0xff]
    %v146 = vld [vmem:[%s6] sm:$0x1]
    %v147 = vld [vmem:[%s7] sm:$0xff]
    %v148 = vld [vmem:[%s7 + $0x8] sm:$0xff]
    %v149 = vld [vmem:[%s7 + $0x10] sm:$0xff]
    %v150 = vld [vmem:[%s7 + $0x18] sm:$0xff]
    %v151 = vld [vmem:[%s8] sm:$0x1]
    %v152 = vld [vmem:[%s9] sm:$0x1]
    %v153 = vld [vmem:[%s10] sm:$0x1]
    %v154 = vld [vmem:[%s11] sm:$0xff]
    %v155 = vld [vmem:[%s11 + $0x8] sm:$0xff]
    %v156 = vld [vmem:[%s11 + $0x10] sm:$0xff]
    %v157 = vld [vmem:[%s11 + $0x18] sm:$0xff]
    %v158 = vld [vmem:[%s12] sm:$0x1]
    %v159 = vld [vmem:[%s13] sm:$0xff]
    %v160 = vld [vmem:[%s13 + $0x8] sm:$0xff]
    %v161 = vld [vmem:[%s13 + $0x10] sm:$0xff]
    %v162 = vld [vmem:[%s13 + $0x18] sm:$0xff]
    %v163 = vld [vmem:[%s13 + $0x20] sm:$0xff]
    %v164 = vld [vmem:[%s13 + $0x28] sm:$0xff]
    %v165 = vld [vmem:[%s13 + $0x30] sm:$0xff]
    %v166 = vld [vmem:[%s13 + $0x38] sm:$0xff]
    %v167 = vld [vmem:[%s14] sm:$0x1]
    %v168 = vld [vmem:[%s15] sm:$0x1]
    %v169 = vld [vmem:[%s16] sm:$0x1]
    %v170 = vpack.c.bf16 %v140, %v139
    %v171 = vpack.c.bf16 %v143, %v142
    %v172 = vpack.c.bf16 %v145, %v144
    %v174 = vlaneseq
    %v175 = vshrl.u32 %v174, 7
    %v176 = vsub.s32 0, %v175
    %v177 = vrot.slane %v146, %v176
    %v180 = vsel %vm97, %v170, 0
    %182 = vmatprep.subr.bf16.mxu0 0
    %183 = vmatpush1.bf16.msra.mxu0 %v171
    %184 = vmatprep.subr.bf16.mxu0 0
    %185 = vmatpush1.bf16.msra.mxu0 %v172
    %186 = vmatprep.subr.bf16.mxu0 0
    %187 = vmatpush1.bf16.msra.mxu0 0
    %188 = vmatprep.subr.bf16.mxu0 0
    %189 = vmatpush1.bf16.msra.mxu0 0
    %190 = vmatprep.subr.bf16.mxu0 0
    %191 = vmatpush1.bf16.msra.mxu0 0
    %192 = vmatprep.subr.bf16.mxu0 0
    %193 = vmatpush1.bf16.msra.mxu0 0
    %194 = vmatprep.subr.bf16.mxu0 0
    %195 = vmatpush1.bf16.msra.mxu0 0
    %196 = vmatprep.subr.bf16.mxu0 0
    %197 = vmatpush1.bf16.msra.mxu0 0
    %198 = vmatprep.subr.bf16.mxu0 0
    %199 = vmatpush1.bf16.msra.mxu0 0
    %200 = vmatprep.subr.bf16.mxu0 0
    %201 = vmatpush1.bf16.msra.mxu0 0
    %202 = vmatprep.subr.bf16.mxu0 0
    %203 = vmatpush1.bf16.msra.mxu0 0
    %204 = vmatprep.subr.bf16.mxu0 0
    %205 = vmatpush1.bf16.msra.mxu0 0
    %206 = vmatprep.subr.bf16.mxu0 0
    %207 = vmatpush1.bf16.msra.mxu0 0
    %208 = vmatprep.subr.bf16.mxu0 0
    %209 = vmatpush1.bf16.msra.mxu0 0
    %210 = vmatprep.subr.bf16.mxu0 0
    %211 = vmatpush1.bf16.msra.mxu0 0
    %212 = vmatprep.subr.bf16.mxu0 0
    %213 = vmatpush1.bf16.msra.mxu0 0
    %214 = vmatprep.mubr.bf16.mxu0 0
    %215 = vmatmul.mubr.bf16.gmra.mrb[0].mxu0 %v180
    %v216 = vpop.f32.mrb[0].mxu0
    %v217 = vadd.f32 %v177, %v216
    %v218 = vpop.f32.mrb[0].mxu0
    %v219 = vpop.f32.mrb[0].mxu0
    %v220 = vadd.f32 %v177, %v219
    %v221 = vpop.f32.mrb[0].mxu0
    %222 = vdwg.mxu0
    %v223 = vmul.f32 %v217, 0.25
    %v224 = vmul.f32 %v220, 0.25
    %227 = vrot.lane.b32.xlu0 %v223, 112
    %v228 = vpop.permute.xlu0 %227
    %229 = vrot.lane.b32.xlu0 %v224, 112
    %v230 = vpop.permute.xlu0 %229
    %235 = vrot.lane.b32.xlu0 %v217, 112
    %v236 = vpop.permute.xlu0 %235
    %237 = vrot.lane.b32.xlu0 %v220, 112
    %v238 = vpop.permute.xlu0 %237
    %v241 = vpack.c.bf16 %v223, %v223
    %v242 = vpack.c.bf16 %v224, %v224
    %v243 = vpack.c.bf16 %v228, %v228
    %v244 = vpack.c.bf16 %v230, %v230
    %v245 = vpack.c.bf16 %v217, %v217
    %v246 = vpack.c.bf16 %v220, %v220
    %v247 = vpack.c.bf16 %v236, %v236
    %v248 = vpack.c.bf16 %v238, %v238
    %v250 = vrot.slane %v141, 6
    %vm252 = vcmask 1041408
    %v253 = vsel %vm252, %v141, %v250
    %v256 = vunpack.c.l.s4 1966171168
    %v257 = vunpack.c.0.s8 %v256
    %v258 = vlaneseq
    %v259 = vshrl.u32 %v258, 7
    %v260 = vsub.s32 %v257, %v259
    %v261 = vrot.slane %v253, %v260
    %v262 = vcombine.high %v261, %v261
    %v264 = vunpack.c.l.s4 1966171168
    %v265 = vunpack.c.0.s8 %v264
    %v266 = vlaneseq
    %v267 = vshrl.u32 %v266, 7
    %v268 = vsub.s32 %v265, %v267
    %v269 = vrot.slane %v261, %v268
    %v271 = vunpack.c.l.s4 1966171168
    %v272 = vunpack.c.0.s8 %v271
    %v273 = vlaneseq
    %v274 = vshrl.u32 %v273, 7
    %v275 = vsub.s32 %v272, %v274
    %v276 = vrot.slane %v262, %v275
    %v277 = vcombine.high %v269, %v269
    %v278 = vcombine.high %v276, %v276
    %v279 = vlaneseq
    %v280 = vshrl.u32 %v279, 7
    %v281 = vsub.s32 0, %v280
    %v282 = vrot.slane %v269, %v281
    %v283 = vlaneseq
    %v284 = vshrl.u32 %v283, 7
    %v285 = vsub.s32 0, %v284
    %v286 = vrot.slane %v276, %v285
    %v287 = vlaneseq
    %v288 = vshrl.u32 %v287, 7
    %v289 = vsub.s32 0, %v288
    %v290 = vrot.slane %v277, %v289
    %v291 = vlaneseq
    %v292 = vshrl.u32 %v291, 7
    %v293 = vsub.s32 0, %v292
    %v294 = vrot.slane %v278, %v293
    %300 = vrot.lane.b32.xlu0 %v245, 96
    %v301 = vpop.permute.xlu0 %300
    %vm302 = vcmask 130048
    %v304 = vsel %vm302, %v241, 0
    %v307 = vsel %vm302, %v301, 0
    %309 = vmatprep.subr.bf16.mxu0 0
    %310 = vmatpush1.bf16.xpose.msra.mxu0 %v307
    %311 = vmatprep.subr.bf16.mxu0 0
    %312 = vmatpush1.bf16.xpose.msra.mxu0 0
    %313 = vmatprep.subr.bf16.mxu0 0
    %314 = vmatpush1.bf16.xpose.msra.mxu0 0
    %315 = vmatprep.subr.bf16.mxu0 0
    %316 = vmatpush1.bf16.xpose.msra.mxu0 0
    %317 = vmatprep.subr.bf16.mxu0 0
    %318 = vmatpush1.bf16.xpose.msra.mxu0 0
    %319 = vmatprep.subr.bf16.mxu0 0
    %320 = vmatpush1.bf16.xpose.msra.mxu0 0
    %321 = vmatprep.subr.bf16.mxu0 0
    %322 = vmatpush1.bf16.xpose.msra.mxu0 0
    %323 = vmatprep.subr.bf16.mxu0 0
    %324 = vmatpush1.bf16.xpose.msra.mxu0 0
    %325 = vmatprep.subr.bf16.mxu0 0
    %326 = vmatpush1.bf16.xpose.msra.mxu0 0
    %327 = vmatprep.subr.bf16.mxu0 0
    %328 = vmatpush1.bf16.xpose.msra.mxu0 0
    %329 = vmatprep.subr.bf16.mxu0 0
    %330 = vmatpush1.bf16.xpose.msra.mxu0 0
    %331 = vmatprep.subr.bf16.mxu0 0
    %332 = vmatpush1.bf16.xpose.msra.mxu0 0
    %333 = vmatprep.subr.bf16.mxu0 0
    %334 = vmatpush1.bf16.xpose.msra.mxu0 0
    %335 = vmatprep.subr.bf16.mxu0 0
    %336 = vmatpush1.bf16.xpose.msra.mxu0 0
    %337 = vmatprep.subr.bf16.mxu0 0
    %338 = vmatpush1.bf16.xpose.msra.mxu0 0
    %339 = vmatprep.subr.bf16.mxu0 0
    %340 = vmatpush1.bf16.xpose.msra.mxu0 0
    %341 = vmatprep.mubr.bf16.mxu0 0
    %342 = vmatmul.mubr.bf16.gmra.mrb[0].mxu0 %v304
    %v343 = vpop.f32.mrb[0].mxu0
    %v344 = vadd.f32 %v282, %v343
    %v345 = vpop.f32.mrb[0].mxu0
    %v346 = vpop.f32.mrb[0].mxu0
    %v347 = vpop.f32.mrb[0].mxu0
    %348 = vdwg.mxu0
    %350 = vrot.lane.b32.xlu0 %v246, 96
    %v351 = vpop.permute.xlu0 %350
    %v353 = vsel %vm302, %v242, 0
    %v356 = vsel %vm302, %v351, 0
    %358 = vmatprep.subr.bf16.mxu0 0
    %359 = vmatpush1.bf16.xpose.msra.mxu0 %v356
    %360 = vmatprep.subr.bf16.mxu0 0
    %361 = vmatpush1.bf16.xpose.msra.mxu0 0
    %362 = vmatprep.subr.bf16.mxu0 0
    %363 = vmatpush1.bf16.xpose.msra.mxu0 0
    %364 = vmatprep.subr.bf16.mxu0 0
    %365 = vmatpush1.bf16.xpose.msra.mxu0 0
    %366 = vmatprep.subr.bf16.mxu0 0
    %367 = vmatpush1.bf16.xpose.msra.mxu0 0
    %368 = vmatprep.subr.bf16.mxu0 0
    %369 = vmatpush1.bf16.xpose.msra.mxu0 0
    %370 = vmatprep.subr.bf16.mxu0 0
    %371 = vmatpush1.bf16.xpose.msra.mxu0 0
    %372 = vmatprep.subr.bf16.mxu0 0
    %373 = vmatpush1.bf16.xpose.msra.mxu0 0
    %374 = vmatprep.subr.bf16.mxu0 0
    %375 = vmatpush1.bf16.xpose.msra.mxu0 0
    %376 = vmatprep.subr.bf16.mxu0 0
    %377 = vmatpush1.bf16.xpose.msra.mxu0 0
    %378 = vmatprep.subr.bf16.mxu0 0
    %379 = vmatpush1.bf16.xpose.msra.mxu0 0
    %380 = vmatprep.subr.bf16.mxu0 0
    %381 = vmatpush1.bf16.xpose.msra.mxu0 0
    %382 = vmatprep.subr.bf16.mxu0 0
    %383 = vmatpush1.bf16.xpose.msra.mxu0 0
    %384 = vmatprep.subr.bf16.mxu0 0
    %385 = vmatpush1.bf16.xpose.msra.mxu0 0
    %386 = vmatprep.subr.bf16.mxu0 0
    %387 = vmatpush1.bf16.xpose.msra.mxu0 0
    %388 = vmatprep.subr.bf16.mxu0 0
    %389 = vmatpush1.bf16.xpose.msra.mxu0 0
    %390 = vmatprep.mubr.bf16.mxu0 0
    %391 = vmatmul.mubr.bf16.gmra.mrb[0].mxu0 %v353
    %v392 = vpop.f32.mrb[0].mxu0
    %v393 = vadd.f32 %v286, %v392
    %v394 = vpop.f32.mrb[0].mxu0
    %v395 = vpop.f32.mrb[0].mxu0
    %v396 = vpop.f32.mrb[0].mxu0
    %397 = vdwg.mxu0
    %399 = vrot.lane.b32.xlu0 %v247, 96
    %v400 = vpop.permute.xlu0 %399
    %v402 = vsel %vm302, %v243, 0
    %v405 = vsel %vm302, %v400, 0
    %407 = vmatprep.subr.bf16.mxu0 0
    %408 = vmatpush1.bf16.xpose.msra.mxu0 %v405
    %409 = vmatprep.subr.bf16.mxu0 0
    %410 = vmatpush1.bf16.xpose.msra.mxu0 0
    %411 = vmatprep.subr.bf16.mxu0 0
    %412 = vmatpush1.bf16.xpose.msra.mxu0 0
    %413 = vmatprep.subr.bf16.mxu0 0
    %414 = vmatpush1.bf16.xpose.msra.mxu0 0
    %415 = vmatprep.subr.bf16.mxu0 0
    %416 = vmatpush1.bf16.xpose.msra.mxu0 0
    %417 = vmatprep.subr.bf16.mxu0 0
    %418 = vmatpush1.bf16.xpose.msra.mxu0 0
    %419 = vmatprep.subr.bf16.mxu0 0
    %420 = vmatpush1.bf16.xpose.msra.mxu0 0
    %421 = vmatprep.subr.bf16.mxu0 0
    %422 = vmatpush1.bf16.xpose.msra.mxu0 0
    %423 = vmatprep.subr.bf16.mxu0 0
    %424 = vmatpush1.bf16.xpose.msra.mxu0 0
    %425 = vmatprep.subr.bf16.mxu0 0
    %426 = vmatpush1.bf16.xpose.msra.mxu0 0
    %427 = vmatprep.subr.bf16.mxu0 0
    %428 = vmatpush1.bf16.xpose.msra.mxu0 0
    %429 = vmatprep.subr.bf16.mxu0 0
    %430 = vmatpush1.bf16.xpose.msra.mxu0 0
    %431 = vmatprep.subr.bf16.mxu0 0
    %432 = vmatpush1.bf16.xpose.msra.mxu0 0
    %433 = vmatprep.subr.bf16.mxu0 0
    %434 = vmatpush1.bf16.xpose.msra.mxu0 0
    %435 = vmatprep.subr.bf16.mxu0 0
    %436 = vmatpush1.bf16.xpose.msra.mxu0 0
    %437 = vmatprep.subr.bf16.mxu0 0
    %438 = vmatpush1.bf16.xpose.msra.mxu0 0
    %439 = vmatprep.mubr.bf16.mxu0 0
    %440 = vmatmul.mubr.bf16.gmra.mrb[0].mxu0 %v402
    %v441 = vpop.f32.mrb[0].mxu0
    %v442 = vadd.f32 %v290, %v441
    %v443 = vpop.f32.mrb[0].mxu0
    %v444 = vpop.f32.mrb[0].mxu0
    %v445 = vpop.f32.mrb[0].mxu0
    %446 = vdwg.mxu0
    %448 = vrot.lane.b32.xlu0 %v248, 96
    %v449 = vpop.permute.xlu0 %448
    %v451 = vsel %vm302, %v244, 0
    %v454 = vsel %vm302, %v449, 0
    %456 = vmatprep.subr.bf16.mxu0 0
    %457 = vmatpush1.bf16.xpose.msra.mxu0 %v454
    %458 = vmatprep.subr.bf16.mxu0 0
    %459 = vmatpush1.bf16.xpose.msra.mxu0 0
    %460 = vmatprep.subr.bf16.mxu0 0
    %461 = vmatpush1.bf16.xpose.msra.mxu0 0
    %462 = vmatprep.subr.bf16.mxu0 0
    %463 = vmatpush1.bf16.xpose.msra.mxu0 0
    %464 = vmatprep.subr.bf16.mxu0 0
    %465 = vmatpush1.bf16.xpose.msra.mxu0 0
    %466 = vmatprep.subr.bf16.mxu0 0
    %467 = vmatpush1.bf16.xpose.msra.mxu0 0
    %468 = vmatprep.subr.bf16.mxu0 0
    %469 = vmatpush1.bf16.xpose.msra.mxu0 0
    %470 = vmatprep.subr.bf16.mxu0 0
    %471 = vmatpush1.bf16.xpose.msra.mxu0 0
    %472 = vmatprep.subr.bf16.mxu0 0
    %473 = vmatpush1.bf16.xpose.msra.mxu0 0
    %474 = vmatprep.subr.bf16.mxu0 0
    %475 = vmatpush1.bf16.xpose.msra.mxu0 0
    %476 = vmatprep.subr.bf16.mxu0 0
    %477 = vmatpush1.bf16.xpose.msra.mxu0 0
    %478 = vmatprep.subr.bf16.mxu0 0
    %479 = vmatpush1.bf16.xpose.msra.mxu0 0
    %480 = vmatprep.subr.bf16.mxu0 0
    %481 = vmatpush1.bf16.xpose.msra.mxu0 0
    %482 = vmatprep.subr.bf16.mxu0 0
    %483 = vmatpush1.bf16.xpose.msra.mxu0 0
    %484 = vmatprep.subr.bf16.mxu0 0
    %485 = vmatpush1.bf16.xpose.msra.mxu0 0
    %486 = vmatprep.subr.bf16.mxu0 0
    %487 = vmatpush1.bf16.xpose.msra.mxu0 0
    %488 = vmatprep.mubr.bf16.mxu0 0
    %489 = vmatmul.mubr.bf16.gmra.mrb[0].mxu0 %v451
    %v490 = vpop.f32.mrb[0].mxu0
    %v491 = vadd.f32 %v294, %v490
    %v492 = vpop.f32.mrb[0].mxu0
    %v493 = vpop.f32.mrb[0].mxu0
    %v494 = vpop.f32.mrb[0].mxu0
    %495 = vdwg.mxu0
    %vm496 = vcmask 64512
    %v497 = vsel %vm496, %v344, -inf
    %498 = vmax.xlane.f32.xlu0 %v497
    %v499 = vpop.xlane.xlu0 %498
    %v500 = vsel %vm496, %v393, -inf
    %501 = vmax.xlane.f32.xlu0 %v500
    %v502 = vpop.xlane.xlu0 %501
    %v503 = vsel %vm496, %v442, -inf
    %504 = vmax.xlane.f32.xlu0 %v503
    %v505 = vpop.xlane.xlu0 %504
    %v506 = vsel %vm496, %v491, -inf
    %507 = vmax.xlane.f32.xlu0 %v506
    %v508 = vpop.xlane.xlu0 %507
    %v509 = vsub.f32 %v344, %v499
    %v510 = vsub.f32 %v393, %v502
    %v511 = vsub.f32 %v442, %v505
    %v512 = vsub.f32 %v491, %v508
    %v513 = vmul.f32 %v509, 1.442695
    %v514 = vpow.pop %v513
    %v515 = vmul.f32 %v510, 1.442695
    %v516 = vpow.pop %v515
    %v517 = vmul.f32 %v511, 1.442695
    %v518 = vpow.pop %v517
    %v519 = vmul.f32 %v512, 1.442695
    %v520 = vpow.pop %v519
    %v521 = vsel %vm496, %v514, 0.0
    %522 = vadd.xlane.f32.xlu0 %v521
    %v523 = vpop.xlane.xlu0 %522
    %v524 = vsel %vm496, %v516, 0.0
    %525 = vadd.xlane.f32.xlu0 %v524
    %v526 = vpop.xlane.xlu0 %525
    %v527 = vsel %vm496, %v518, 0.0
    %528 = vadd.xlane.f32.xlu0 %v527
    %v529 = vpop.xlane.xlu0 %528
    %v530 = vsel %vm496, %v520, 0.0
    %531 = vadd.xlane.f32.xlu0 %v530
    %v532 = vpop.xlane.xlu0 %531
    %v533 = vrcp.pop %v523
    %v534 = vmul.f32 %v514, %v533
    %v535 = vrcp.pop %v526
    %v536 = vmul.f32 %v516, %v535
    %v537 = vrcp.pop %v529
    %v538 = vmul.f32 %v518, %v537
    %v539 = vrcp.pop %v532
    %v540 = vmul.f32 %v520, %v539
    %v541 = vpack.c.bf16 %v534, %v534
    %v542 = vpack.c.bf16 %v536, %v536
    %v543 = vpack.c.bf16 %v538, %v538
    %v544 = vpack.c.bf16 %v540, %v540
    %545 = vrot.lane.b32.xlu0 %v245, 64
    %v546 = vpop.permute.xlu0 %545
    %v548 = vsel %vm496, %v541, 0
    %vm550 = vcmask 1043456
    %v552 = vsel %vm550, %v546, 0
    %554 = vmatprep.subr.bf16.mxu0 0
    %555 = vmatpush1.bf16.msra.mxu0 %v552
    %556 = vmatprep.subr.bf16.mxu0 0
    %557 = vmatpush1.bf16.msra.mxu0 0
    %558 = vmatprep.subr.bf16.mxu0 0
    %559 = vmatpush1.bf16.msra.mxu0 0
    %560 = vmatprep.subr.bf16.mxu0 0
    %561 = vmatpush1.bf16.msra.mxu0 0
    %562 = vmatprep.subr.bf16.mxu0 0
    %563 = vmatpush1.bf16.msra.mxu0 0
    %564 = vmatprep.subr.bf16.mxu0 0
    %565 = vmatpush1.bf16.msra.mxu0 0
    %566 = vmatprep.subr.bf16.mxu0 0
    %567 = vmatpush1.bf16.msra.mxu0 0
    %568 = vmatprep.subr.bf16.mxu0 0
    %569 = vmatpush1.bf16.msra.mxu0 0
    %570 = vmatprep.subr.bf16.mxu0 0
    %571 = vmatpush1.bf16.msra.mxu0 0
    %572 = vmatprep.subr.bf16.mxu0 0
    %573 = vmatpush1.bf16.msra.mxu0 0
    %574 = vmatprep.subr.bf16.mxu0 0
    %575 = vmatpush1.bf16.msra.mxu0 0
    %576 = vmatprep.subr.bf16.mxu0 0
    %577 = vmatpush1.bf16.msra.mxu0 0
    %578 = vmatprep.subr.bf16.mxu0 0
    %579 = vmatpush1.bf16.msra.mxu0 0
    %580 = vmatprep.subr.bf16.mxu0 0
    %581 = vmatpush1.bf16.msra.mxu0 0
    %582 = vmatprep.subr.bf16.mxu0 0
    %583 = vmatpush1.bf16.msra.mxu0 0
    %584 = vmatprep.subr.bf16.mxu0 0
    %585 = vmatpush1.bf16.msra.mxu0 0
    %586 = vmatprep.mubr.bf16.mxu0 0
    %587 = vmatmul.mubr.bf16.gmra.mrb[0].mxu0 %v548
    %v588 = vpop.f32.mrb[0].mxu0
    %v589 = vadd.f32 0.0, %v588
    %v590 = vpop.f32.mrb[0].mxu0
    %v591 = vpop.f32.mrb[0].mxu0
    %v592 = vpop.f32.mrb[0].mxu0
    %593 = vdwg.mxu0
    %594 = vrot.lane.b32.xlu0 %v246, 64
    %v595 = vpop.permute.xlu0 %594
    %v597 = vsel %vm496, %v542, 0
    %v600 = vsel %vm550, %v595, 0
    %602 = vmatprep.subr.bf16.mxu0 0
    %603 = vmatpush1.bf16.msra.mxu0 %v600
    %604 = vmatprep.subr.bf16.mxu0 0
    %605 = vmatpush1.bf16.msra.mxu0 0
    %606 = vmatprep.subr.bf16.mxu0 0
    %607 = vmatpush1.bf16.msra.mxu0 0
    %608 = vmatprep.subr.bf16.mxu0 0
    %609 = vmatpush1.bf16.msra.mxu0 0
    %610 = vmatprep.subr.bf16.mxu0 0
    %611 = vmatpush1.bf16.msra.mxu0 0
    %612 = vmatprep.subr.bf16.mxu0 0
    %613 = vmatpush1.bf16.msra.mxu0 0
    %614 = vmatprep.subr.bf16.mxu0 0
    %615 = vmatpush1.bf16.msra.mxu0 0
    %616 = vmatprep.subr.bf16.mxu0 0
    %617 = vmatpush1.bf16.msra.mxu0 0
    %618 = vmatprep.subr.bf16.mxu0 0
    %619 = vmatpush1.bf16.msra.mxu0 0
    %620 = vmatprep.subr.bf16.mxu0 0
    %621 = vmatpush1.bf16.msra.mxu0 0
    %622 = vmatprep.subr.bf16.mxu0 0
    %623 = vmatpush1.bf16.msra.mxu0 0
    %624 = vmatprep.subr.bf16.mxu0 0
    %625 = vmatpush1.bf16.msra.mxu0 0
    %626 = vmatprep.subr.bf16.mxu0 0
    %627 = vmatpush1.bf16.msra.mxu0 0
    %628 = vmatprep.subr.bf16.mxu0 0
    %629 = vmatpush1.bf16.msra.mxu0 0
    %630 = vmatprep.subr.bf16.mxu0 0
    %631 = vmatpush1.bf16.msra.mxu0 0
    %632 = vmatprep.subr.bf16.mxu0 0
    %633 = vmatpush1.bf16.msra.mxu0 0
    %634 = vmatprep.mubr.bf16.mxu0 0
    %635 = vmatmul.mubr.bf16.gmra.mrb[0].mxu0 %v597
    %v636 = vpop.f32.mrb[0].mxu0
    %v637 = vadd.f32 0.0, %v636
    %v638 = vpop.f32.mrb[0].mxu0
    %v639 = vpop.f32.mrb[0].mxu0
    %v640 = vpop.f32.mrb[0].mxu0
    %641 = vdwg.mxu0
    %642 = vrot.lane.b32.xlu0 %v247, 64
    %v643 = vpop.permute.xlu0 %642
    %v645 = vsel %vm496, %v543, 0
    %v648 = vsel %vm550, %v643, 0
    %650 = vmatprep.subr.bf16.mxu0 0
    %651 = vmatpush1.bf16.msra.mxu0 %v648
    %652 = vmatprep.subr.bf16.mxu0 0
    %653 = vmatpush1.bf16.msra.mxu0 0
    %654 = vmatprep.subr.bf16.mxu0 0
    %655 = vmatpush1.bf16.msra.mxu0 0
    %656 = vmatprep.subr.bf16.mxu0 0
    %657 = vmatpush1.bf16.msra.mxu0 0
    %658 = vmatprep.subr.bf16.mxu0 0
    %659 = vmatpush1.bf16.msra.mxu0 0
    %660 = vmatprep.subr.bf16.mxu0 0
    %661 = vmatpush1.bf16.msra.mxu0 0
    %662 = vmatprep.subr.bf16.mxu0 0
    %663 = vmatpush1.bf16.msra.mxu0 0
    %664 = vmatprep.subr.bf16.mxu0 0
    %665 = vmatpush1.bf16.msra.mxu0 0
    %666 = vmatprep.subr.bf16.mxu0 0
    %667 = vmatpush1.bf16.msra.mxu0 0
    %668 = vmatprep.subr.bf16.mxu0 0
    %669 = vmatpush1.bf16.msra.mxu0 0
    %670 = vmatprep.subr.bf16.mxu0 0
    %671 = vmatpush1.bf16.msra.mxu0 0
    %672 = vmatprep.subr.bf16.mxu0 0
    %673 = vmatpush1.bf16.msra.mxu0 0
    %674 = vmatprep.subr.bf16.mxu0 0
    %675 = vmatpush1.bf16.msra.mxu0 0
    %676 = vmatprep.subr.bf16.mxu0 0
    %677 = vmatpush1.bf16.msra.mxu0 0
    %678 = vmatprep.subr.bf16.mxu0 0
    %679 = vmatpush1.bf16.msra.mxu0 0
    %680 = vmatprep.subr.bf16.mxu0 0
    %681 = vmatpush1.bf16.msra.mxu0 0
    %682 = vmatprep.mubr.bf16.mxu0 0
    %683 = vmatmul.mubr.bf16.gmra.mrb[0].mxu0 %v645
    %v684 = vpop.f32.mrb[0].mxu0
    %v685 = vadd.f32 0.0, %v684
    %v686 = vpop.f32.mrb[0].mxu0
    %v687 = vpop.f32.mrb[0].mxu0
    %v688 = vpop.f32.mrb[0].mxu0
    %689 = vdwg.mxu0
    %690 = vrot.lane.b32.xlu0 %v248, 64
    %v691 = vpop.permute.xlu0 %690
    %v693 = vsel %vm496, %v544, 0
    %v696 = vsel %vm550, %v691, 0
    %698 = vmatprep.subr.bf16.mxu0 0
    %699 = vmatpush1.bf16.msra.mxu0 %v696
    %700 = vmatprep.subr.bf16.mxu0 0
    %701 = vmatpush1.bf16.msra.mxu0 0
    %702 = vmatprep.subr.bf16.mxu0 0
    %703 = vmatpush1.bf16.msra.mxu0 0
    %704 = vmatprep.subr.bf16.mxu0 0
    %705 = vmatpush1.bf16.msra.mxu0 0
    %706 = vmatprep.subr.bf16.mxu0 0
    %707 = vmatpush1.bf16.msra.mxu0 0
    %708 = vmatprep.subr.bf16.mxu0 0
    %709 = vmatpush1.bf16.msra.mxu0 0
    %710 = vmatprep.subr.bf16.mxu0 0
    %711 = vmatpush1.bf16.msra.mxu0 0
    %712 = vmatprep.subr.bf16.mxu0 0
    %713 = vmatpush1.bf16.msra.mxu0 0
    %714 = vmatprep.subr.bf16.mxu0 0
    %715 = vmatpush1.bf16.msra.mxu0 0
    %716 = vmatprep.subr.bf16.mxu0 0
    %717 = vmatpush1.bf16.msra.mxu0 0
    %718 = vmatprep.subr.bf16.mxu0 0
    %719 = vmatpush1.bf16.msra.mxu0 0
    %720 = vmatprep.subr.bf16.mxu0 0
    %721 = vmatpush1.bf16.msra.mxu0 0
    %722 = vmatprep.subr.bf16.mxu0 0
    %723 = vmatpush1.bf16.msra.mxu0 0
    %724 = vmatprep.subr.bf16.mxu0 0
    %725 = vmatpush1.bf16.msra.mxu0 0
    %726 = vmatprep.subr.bf16.mxu0 0
    %727 = vmatpush1.bf16.msra.mxu0 0
    %728 = vmatprep.subr.bf16.mxu0 0
    %729 = vmatpush1.bf16.msra.mxu0 0
    %730 = vmatprep.mubr.bf16.mxu0 0
    %731 = vmatmul.mubr.bf16.gmra.mrb[0].mxu0 %v693
    %v732 = vpop.f32.mrb[0].mxu0
    %v733 = vadd.f32 0.0, %v732
    %v734 = vpop.f32.mrb[0].mxu0
    %v735 = vpop.f32.mrb[0].mxu0
    %v736 = vpop.f32.mrb[0].mxu0
    %737 = vdwg.mxu0
    %740 = vrot.lane.b32.xlu0 %v685, 16
    %v741 = vpop.permute.xlu0 %740
    %742 = vrot.lane.b32.xlu0 %v733, 16
    %v743 = vpop.permute.xlu0 %742
    %v746 = vsel %vm302, %v589, %v741
    %v747 = vsel %vm302, %v637, %v743
    %v748 = vpack.c.bf16 %v747, %v746
    %v749 = vpack.c.bf16 %v148, %v147
    %v750 = vpack.c.bf16 %v150, %v149
    %v752 = vlaneseq
    %v753 = vshrl.u32 %v752, 7
    %v754 = vsub.s32 0, %v753
    %v755 = vrot.slane %v151, %v754
    %v758 = vsel %vm97, %v748, 0
    %760 = vmatprep.subr.bf16.mxu0 0
    %761 = vmatpush1.bf16.msra.mxu0 %v749
    %762 = vmatprep.subr.bf16.mxu0 0
    %763 = vmatpush1.bf16.msra.mxu0 %v750
    %764 = vmatprep.subr.bf16.mxu0 0
    %765 = vmatpush1.bf16.msra.mxu0 0
    %766 = vmatprep.subr.bf16.mxu0 0
    %767 = vmatpush1.bf16.msra.mxu0 0
    %768 = vmatprep.subr.bf16.mxu0 0
    %769 = vmatpush1.bf16.msra.mxu0 0
    %770 = vmatprep.subr.bf16.mxu0 0
    %771 = vmatpush1.bf16.msra.mxu0 0
    %772 = vmatprep.subr.bf16.mxu0 0
    %773 = vmatpush1.bf16.msra.mxu0 0
    %774 = vmatprep.subr.bf16.mxu0 0
    %775 = vmatpush1.bf16.msra.mxu0 0
    %776 = vmatprep.subr.bf16.mxu0 0
    %777 = vmatpush1.bf16.msra.mxu0 0
    %778 = vmatprep.subr.bf16.mxu0 0
    %779 = vmatpush1.bf16.msra.mxu0 0
    %780 = vmatprep.subr.bf16.mxu0 0
    %781 = vmatpush1.bf16.msra.mxu0 0
    %782 = vmatprep.subr.bf16.mxu0 0
    %783 = vmatpush1.bf16.msra.mxu0 0
    %784 = vmatprep.subr.bf16.mxu0 0
    %785 = vmatpush1.bf16.msra.mxu0 0
    %786 = vmatprep.subr.bf16.mxu0 0
    %787 = vmatpush1.bf16.msra.mxu0 0
    %788 = vmatprep.subr.bf16.mxu0 0
    %789 = vmatpush1.bf16.msra.mxu0 0
    %790 = vmatprep.subr.bf16.mxu0 0
    %791 = vmatpush1.bf16.msra.mxu0 0
    %792 = vmatprep.mubr.bf16.mxu0 0
    %793 = vmatmul.mubr.bf16.gmra.mrb[0].mxu0 %v758
    %v794 = vpop.f32.mrb[0].mxu0
    %v795 = vadd.f32 %v755, %v794
    %v796 = vpop.f32.mrb[0].mxu0
    %v797 = vpop.f32.mrb[0].mxu0
    %v798 = vadd.f32 %v755, %v797
    %v799 = vpop.f32.mrb[0].mxu0
    %800 = vdwg.mxu0
    %v801 = vadd.f32 %v139, %v795
    %v802 = vadd.f32 %v140, %v798
    %v803 = vsel %vm97, %v801, 0.0
    %804 = vadd.xlane.f32.xlu0 %v803
    %v805 = vpop.xlane.xlu0 %804
    %v806 = vsel %vm97, %v802, 0.0
    %807 = vadd.xlane.f32.xlu0 %v806
    %v808 = vpop.xlane.xlu0 %807
    %v809 = vmul.f32 %v805, %v104
    %v810 = vmul.f32 %v808, %v104
    %v811 = vsub.f32 %v801, %v809
    %v812 = vsub.f32 %v802, %v810
    %v813 = vmul.f32 %v811, %v811
    %v814 = vmul.f32 %v812, %v812
    %v815 = vsel %vm97, %v813, 0.0
    %816 = vadd.xlane.f32.xlu0 %v815
    %v817 = vpop.xlane.xlu0 %816
    %v818 = vsel %vm97, %v814, 0.0
    %819 = vadd.xlane.f32.xlu0 %v818
    %v820 = vpop.xlane.xlu0 %819
    %v821 = vmul.f32 %v817, %v104
    %v822 = vmul.f32 %v820, %v104
    %v823 = vadd.f32 %v821, 1e-12
    %v824 = vadd.f32 %v822, 1e-12
    %v825 = vrsqrt.pop %v823
    %v826 = vrsqrt.pop %v824
    %v827 = vmul.f32 %v811, %v825
    %v828 = vmul.f32 %v812, %v826
    %v830 = vlaneseq
    %v831 = vshrl.u32 %v830, 7
    %v832 = vsub.s32 0, %v831
    %v833 = vrot.slane %v152, %v832
    %v835 = vmul.f32 %v827, %v833
    %v836 = vmul.f32 %v828, %v833
    %v838 = vlaneseq
    %v839 = vshrl.u32 %v838, 7
    %v840 = vsub.s32 0, %v839
    %v841 = vrot.slane %v153, %v840
    %v843 = vadd.f32 %v835, %v841
    %v844 = vadd.f32 %v836, %v841
    %v845 = vpack.c.bf16 %v844, %v843
    %v846 = vpack.c.bf16 %v155, %v154
    %v847 = vpack.c.bf16 %v157, %v156
    %v849 = vlaneseq
    %v850 = vshrl.u32 %v849, 7
    %v851 = vsub.s32 0, %v850
    %v852 = vrot.slane %v158, %v851
    %v855 = vsel %vm97, %v845, 0
    %857 = vmatprep.subr.bf16.mxu0 0
    %858 = vmatpush1.bf16.msra.mxu0 %v846
    %859 = vmatprep.subr.bf16.mxu0 0
    %860 = vmatpush1.bf16.msra.mxu0 %v847
    %861 = vmatprep.subr.bf16.mxu0 0
    %862 = vmatpush1.bf16.msra.mxu0 0
    %863 = vmatprep.subr.bf16.mxu0 0
    %864 = vmatpush1.bf16.msra.mxu0 0
    %865 = vmatprep.subr.bf16.mxu0 0
    %866 = vmatpush1.bf16.msra.mxu0 0
    %867 = vmatprep.subr.bf16.mxu0 0
    %868 = vmatpush1.bf16.msra.mxu0 0
    %869 = vmatprep.subr.bf16.mxu0 0
    %870 = vmatpush1.bf16.msra.mxu0 0
    %871 = vmatprep.subr.bf16.mxu0 0
    %872 = vmatpush1.bf16.msra.mxu0 0
    %873 = vmatprep.subr.bf16.mxu0 0
    %874 = vmatpush1.bf16.msra.mxu0 0
    %875 = vmatprep.subr.bf16.mxu0 0
    %876 = vmatpush1.bf16.msra.mxu0 0
    %877 = vmatprep.subr.bf16.mxu0 0
    %878 = vmatpush1.bf16.msra.mxu0 0
    %879 = vmatprep.subr.bf16.mxu0 0
    %880 = vmatpush1.bf16.msra.mxu0 0
    %881 = vmatprep.subr.bf16.mxu0 0
    %882 = vmatpush1.bf16.msra.mxu0 0
    %883 = vmatprep.subr.bf16.mxu0 0
    %884 = vmatpush1.bf16.msra.mxu0 0
    %885 = vmatprep.subr.bf16.mxu0 0
    %886 = vmatpush1.bf16.msra.mxu0 0
    %887 = vmatprep.subr.bf16.mxu0 0
    %888 = vmatpush1.bf16.msra.mxu0 0
    %889 = vmatprep.mubr.bf16.mxu0 0
    %890 = vmatmul.mubr.bf16.gmra.mrb[0].mxu0 %v855
    %v891 = vpop.f32.mrb[0].mxu0
    %v892 = vadd.f32 %v852, %v891
    %v893 = vpop.f32.mrb[0].mxu0
    %v894 = vpop.f32.mrb[0].mxu0
    %v895 = vadd.f32 %v852, %v894
    %v896 = vpop.f32.mrb[0].mxu0
    %897 = vdwg.mxu0
    %v898 = vmul.f32 %v892, %v892
    %v899 = vmul.f32 %v895, %v895
    %v900 = vmul.f32 %v892, %v898
    %v901 = vmul.f32 %v895, %v899
    %v902 = vmul.f32 %v900, 0.044715
    %v903 = vmul.f32 %v901, 0.044715
    %v904 = vadd.f32 %v892, %v902
    %v905 = vadd.f32 %v895, %v903
    %v906 = vmul.f32 %v904, 0.7978846
    %v907 = vmul.f32 %v905, 0.7978846
    %v908 = vtanh.pop %v906
    %v909 = vtanh.pop %v907
    %v910 = vadd.f32 %v908, 1.0
    %v911 = vadd.f32 %v909, 1.0
    %v912 = vmul.f32 %v910, 0.5
    %v913 = vmul.f32 %v911, 0.5
    %v914 = vmul.f32 %v892, %v912
    %v915 = vmul.f32 %v895, %v913
    %v916 = vpack.c.bf16 %v915, %v914
    %v917 = vpack.c.bf16 %v160, %v159
    %v918 = vpack.c.bf16 %v162, %v161
    %v919 = vpack.c.bf16 %v164, %v163
    %v920 = vpack.c.bf16 %v166, %v165
    %v922 = vlaneseq
    %v923 = vshrl.u32 %v922, 7
    %v924 = vsub.s32 0, %v923
    %v925 = vrot.slane %v167, %v924
    %vm927 = vcmask 523264
    %v929 = vsel %vm927, %v916, 0
    %931 = vmatprep.subr.bf16.mxu0 0
    %932 = vmatpush1.bf16.msra.mxu0 %v917
    %933 = vmatprep.subr.bf16.mxu0 0
    %934 = vmatpush1.bf16.msra.mxu0 %v918
    %935 = vmatprep.subr.bf16.mxu0 0
    %936 = vmatpush1.bf16.msra.mxu0 %v919
    %937 = vmatprep.subr.bf16.mxu0 0
    %938 = vmatpush1.bf16.msra.mxu0 %v920
    %939 = vmatprep.subr.bf16.mxu0 0
    %940 = vmatpush1.bf16.msra.mxu0 0
    %941 = vmatprep.subr.bf16.mxu0 0
    %942 = vmatpush1.bf16.msra.mxu0 0
    %943 = vmatprep.subr.bf16.mxu0 0
    %944 = vmatpush1.bf16.msra.mxu0 0
    %945 = vmatprep.subr.bf16.mxu0 0
    %946 = vmatpush1.bf16.msra.mxu0 0
    %947 = vmatprep.subr.bf16.mxu0 0
    %948 = vmatpush1.bf16.msra.mxu0 0
    %949 = vmatprep.subr.bf16.mxu0 0
    %950 = vmatpush1.bf16.msra.mxu0 0
    %951 = vmatprep.subr.bf16.mxu0 0
    %952 = vmatpush1.bf16.msra.mxu0 0
    %953 = vmatprep.subr.bf16.mxu0 0
    %954 = vmatpush1.bf16.msra.mxu0 0
    %955 = vmatprep.subr.bf16.mxu0 0
    %956 = vmatpush1.bf16.msra.mxu0 0
    %957 = vmatprep.subr.bf16.mxu0 0
    %958 = vmatpush1.bf16.msra.mxu0 0
    %959 = vmatprep.subr.bf16.mxu0 0
    %960 = vmatpush1.bf16.msra.mxu0 0
    %961 = vmatprep.subr.bf16.mxu0 0
    %962 = vmatpush1.bf16.msra.mxu0 0
    %963 = vmatprep.mubr.bf16.mxu0 0
    %964 = vmatmul.mubr.bf16.gmra.mrb[0].mxu0 %v929
    %v965 = vpop.f32.mrb[0].mxu0
    %v966 = vadd.f32 %v925, %v965
    %v967 = vpop.f32.mrb[0].mxu0
    %v968 = vpop.f32.mrb[0].mxu0
    %v969 = vadd.f32 %v925, %v968
    %v970 = vpop.f32.mrb[0].mxu0
    %971 = vdwg.mxu0
    %v972 = vadd.f32 %v843, %v966
    %v973 = vadd.f32 %v844, %v969
    %v974 = vsel %vm97, %v972, 0.0
    %975 = vadd.xlane.f32.xlu0 %v974
    %v976 = vpop.xlane.xlu0 %975
    %v977 = vsel %vm97, %v973, 0.0
    %978 = vadd.xlane.f32.xlu0 %v977
    %v979 = vpop.xlane.xlu0 %978
    %v980 = vmul.f32 %v976, %v104
    %v981 = vmul.f32 %v979, %v104
    %v982 = vsub.f32 %v972, %v980
    %v983 = vsub.f32 %v973, %v981
    %v984 = vmul.f32 %v982, %v982
    %v985 = vmul.f32 %v983, %v983
    %v986 = vsel %vm97, %v984, 0.0
    %987 = vadd.xlane.f32.xlu0 %v986
    %v988 = vpop.xlane.xlu0 %987
    %v989 = vsel %vm97, %v985, 0.0
    %990 = vadd.xlane.f32.xlu0 %v989
    %v991 = vpop.xlane.xlu0 %990
    %v992 = vmul.f32 %v988, %v104
    %v993 = vmul.f32 %v991, %v104
    %v994 = vadd.f32 %v992, 1e-12
    %v995 = vadd.f32 %v993, 1e-12
    %v996 = vrsqrt.pop %v994
    %v997 = vrsqrt.pop %v995
    %v998 = vmul.f32 %v982, %v996
    %v999 = vmul.f32 %v983, %v997
    %v1001 = vlaneseq
    %v1002 = vshrl.u32 %v1001, 7
    %v1003 = vsub.s32 0, %v1002
    %v1004 = vrot.slane %v168, %v1003
    %v1006 = vmul.f32 %v998, %v1004
    %v1007 = vmul.f32 %v999, %v1004
    %v1009 = vlaneseq
    %v1010 = vshrl.u32 %v1009, 7
    %v1011 = vsub.s32 0, %v1010
    %v1012 = vrot.slane %v169, %v1011
    %v1014 = vadd.f32 %v1006, %v1012
    %v1015 = vadd.f32 %v1007, %v1012
    %v1016 = vsel %vm97, %v1014, 0.0
    %v1017 = vsel %vm97, %v1015, 0.0
    %1018 = vst [vmem:[#allocation5] sm:$0xff] %v1016
    %1019 = vst [vmem:[#allocation5 + $0x8] sm:$0xff] %v1017
    %v1020 = vld [vmem:[%s2] sm:$0xff]
    %v1022 = vsel %vm302, %v1020, 0
    %1024 = vmatprep.subr.mxu0 0.0
    %1025 = vmatpush1.msra.mxu0 %v1014
    %1026 = vmatprep.subr.mxu0 0.0
    %1027 = vmatpush1.msra.mxu0 %v1015
    %1028 = vmatprep.subr.mxu0 0.0
    %1029 = vmatpush1.msra.mxu0 0.0
    %1030 = vmatprep.subr.mxu0 0.0
    %1031 = vmatpush1.msra.mxu0 0.0
    %1032 = vmatprep.subr.mxu0 0.0
    %1033 = vmatpush1.msra.mxu0 0.0
    %1034 = vmatprep.subr.mxu0 0.0
    %1035 = vmatpush1.msra.mxu0 0.0
    %1036 = vmatprep.subr.mxu0 0.0
    %1037 = vmatpush1.msra.mxu0 0.0
    %1038 = vmatprep.subr.mxu0 0.0
    %1039 = vmatpush1.msra.mxu0 0.0
    %1040 = vmatprep.subr.mxu0 0.0
    %1041 = vmatpush1.msra.mxu0 0.0
    %1042 = vmatprep.subr.mxu0 0.0
    %1043 = vmatpush1.msra.mxu0 0.0
    %1044 = vmatprep.subr.mxu0 0.0
    %1045 = vmatpush1.msra.mxu0 0.0
    %1046 = vmatprep.subr.mxu0 0.0
    %1047 = vmatpush1.msra.mxu0 0.0
    %1048 = vmatprep.subr.mxu0 0.0
    %1049 = vmatpush1.msra.mxu0 0.0
    %1050 = vmatprep.subr.mxu0 0.0
    %1051 = vmatpush1.msra.mxu0 0.0
    %1052 = vmatprep.subr.mxu0 0.0
    %1053 = vmatpush1.msra.mxu0 0.0
    %1054 = vmatprep.subr.mxu0 0.0
    %1055 = vmatpush1.msra.mxu0 0.0
    %1056 = vmatprep.subr.mxu0 0.0
    %1057 = vmatpush1.msra.mxu0 0.0
    %1058 = vmatprep.subr.mxu0 0.0
    %1059 = vmatpush1.msra.mxu0 0.0
    %1060 = vmatprep.subr.mxu0 0.0
    %1061 = vmatpush1.msra.mxu0 0.0
    %1062 = vmatprep.subr.mxu0 0.0
    %1063 = vmatpush1.msra.mxu0 0.0
    %1064 = vmatprep.subr.mxu0 0.0
    %1065 = vmatpush1.msra.mxu0 0.0
    %1066 = vmatprep.subr.mxu0 0.0
    %1067 = vmatpush1.msra.mxu0 0.0
    %1068 = vmatprep.subr.mxu0 0.0
    %1069 = vmatpush1.msra.mxu0 0.0
    %1070 = vmatprep.subr.mxu0 0.0
    %1071 = vmatpush1.msra.mxu0 0.0
    %1072 = vmatprep.subr.mxu0 0.0
    %1073 = vmatpush1.msra.mxu0 0.0
    %1074 = vmatprep.subr.mxu0 0.0
    %1075 = vmatpush1.msra.mxu0 0.0
    %1076 = vmatprep.subr.mxu0 0.0
    %1077 = vmatpush1.msra.mxu0 0.0
    %1078 = vmatprep.subr.mxu0 0.0
    %1079 = vmatpush1.msra.mxu0 0.0
    %1080 = vmatprep.subr.mxu0 0.0
    %1081 = vmatpush1.msra.mxu0 0.0
    %1082 = vmatprep.subr.mxu0 0.0
    %1083 = vmatpush1.msra.mxu0 0.0
    %1084 = vmatprep.subr.mxu0 0.0
    %1085 = vmatpush1.msra.mxu0 0.0
    %1086 = vmatprep.subr.mxu0 0.0
    %1087 = vmatpush1.msra.mxu0 0.0
    %1088 = vmatprep.mubr.f32.mxu0 0.0
    %1089 = vmatmul.mubr.f32.gmra.mrb[0].mxu0 %v1022
    %v1090 = vpop.f32.mrb[0].mxu0
    %v1091 = vadd.f32 0.0, %v1090
    %v1092 = vpop.f32.mrb[0].mxu0
    %1093 = vdwg.mxu0
    %v1094 = vld [vmem:[%s17] sm:$0xff]
    %v1095 = vld [vmem:[%s17 + $0x8] sm:$0xff]
    %v1096 = vld [vmem:[%s17 + $0x10] sm:$0xff]
    %v1097 = vld [vmem:[%s17 + $0x18] sm:$0xff]
    %v1098 = vpack.c.bf16 %v1091, %v1091
    %v1099 = vpack.c.bf16 %v1095, %v1094
    %v1100 = vpack.c.bf16 %v1097, %v1096
    %v1101 = vld [vmem:[%s18] sm:$0x1]
    %v1103 = vlaneseq
    %v1104 = vshrl.u32 %v1103, 7
    %v1105 = vsub.s32 0, %v1104
    %v1106 = vrot.slane %v1101, %v1105
    %v1109 = vsel %vm97, %v1098, 0
    %1111 = vmatprep.subr.bf16.mxu0 0
    %1112 = vmatpush1.bf16.msra.mxu0 %v1099
    %1113 = vmatprep.subr.bf16.mxu0 0
    %1114 = vmatpush1.bf16.msra.mxu0 %v1100
    %1115 = vmatprep.subr.bf16.mxu0 0
    %1116 = vmatpush1.bf16.msra.mxu0 0
    %1117 = vmatprep.subr.bf16.mxu0 0
    %1118 = vmatpush1.bf16.msra.mxu0 0
    %1119 = vmatprep.subr.bf16.mxu0 0
    %1120 = vmatpush1.bf16.msra.mxu0 0
    %1121 = vmatprep.subr.bf16.mxu0 0
    %1122 = vmatpush1.bf16.msra.mxu0 0
    %1123 = vmatprep.subr.bf16.mxu0 0
    %1124 = vmatpush1.bf16.msra.mxu0 0
    %1125 = vmatprep.subr.bf16.mxu0 0
    %1126 = vmatpush1.bf16.msra.mxu0 0
    %1127 = vmatprep.subr.bf16.mxu0 0
    %1128 = vmatpush1.bf16.msra.mxu0 0
    %1129 = vmatprep.subr.bf16.mxu0 0
    %1130 = vmatpush1.bf16.msra.mxu0 0
    %1131 = vmatprep.subr.bf16.mxu0 0
    %1132 = vmatpush1.bf16.msra.mxu0 0
    %1133 = vmatprep.subr.bf16.mxu0 0
    %1134 = vmatpush1.bf16.msra.mxu0 0
    %1135 = vmatprep.subr.bf16.mxu0 0
    %1136 = vmatpush1.bf16.msra.mxu0 0
    %1137 = vmatprep.subr.bf16.mxu0 0
    %1138 = vmatpush1.bf16.msra.mxu0 0
    %1139 = vmatprep.subr.bf16.mxu0 0
    %1140 = vmatpush1.bf16.msra.mxu0 0
    %1141 = vmatprep.subr.bf16.mxu0 0
    %1142 = vmatpush1.bf16.msra.mxu0 0
    %1143 = vmatprep.mubr.bf16.mxu0 0
    %1144 = vmatmul.mubr.bf16.gmra.mrb[0].mxu0 %v1109
    %v1145 = vpop.f32.mrb[0].mxu0
    %v1146 = vadd.f32 %v1106, %v1145
    %v1147 = vpop.f32.mrb[0].mxu0
    %v1148 = vpop.f32.mrb[0].mxu0
    %v1149 = vpop.f32.mrb[0].mxu0
    %1150 = vdwg.mxu0
    %v1151 = vtanh.pop %v1146
    %v1152 = vld [vmem:[%s21] sm:$0xff]
    %v1153 = vld [vmem:[%s21 + $0x8] sm:$0xff]
    %v1154 = vld [vmem:[%s21 + $0x10] sm:$0xff]
    %v1155 = vld [vmem:[%s21 + $0x18] sm:$0xff]
    %v1156 = vpack.c.bf16 %v1151, %v1151
    %v1157 = vpack.c.bf16 %v1153, %v1152
    %v1158 = vpack.c.bf16 %v1155, %v1154
    %v1159 = vld [vmem:[%s22] sm:$0x1]
    %v1161 = vlaneseq
    %v1162 = vshrl.u32 %v1161, 7
    %v1163 = vsub.s32 0, %v1162
    %v1164 = vrot.slane %v1159, %v1163
    %v1167 = vsel %vm97, %v1156, 0
    %1169 = vmatprep.subr.bf16.mxu0 0
    %1170 = vmatpush1.bf16.msra.mxu0 %v1157
    %1171 = vmatprep.subr.bf16.mxu0 0
    %1172 = vmatpush1.bf16.msra.mxu0 %v1158
    %1173 = vmatprep.subr.bf16.mxu0 0
    %1174 = vmatpush1.bf16.msra.mxu0 0
    %1175 = vmatprep.subr.bf16.mxu0 0
    %1176 = vmatpush1.bf16.msra.mxu0 0
    %1177 = vmatprep.subr.bf16.mxu0 0
    %1178 = vmatpush1.bf16.msra.mxu0 0
    %1179 = vmatprep.subr.bf16.mxu0 0
    %1180 = vmatpush1.bf16.msra.mxu0 0
    %1181 = vmatprep.subr.bf16.mxu0 0
    %1182 = vmatpush1.bf16.msra.mxu0 0
    %1183 = vmatprep.subr.bf16.mxu0 0
    %1184 = vmatpush1.bf16.msra.mxu0 0
    %1185 = vmatprep.subr.bf16.mxu0 0
    %1186 = vmatpush1.bf16.msra.mxu0 0
    %1187 = vmatprep.subr.bf16.mxu0 0
    %1188 = vmatpush1.bf16.msra.mxu0 0
    %1189 = vmatprep.subr.bf16.mxu0 0
    %1190 = vmatpush1.bf16.msra.mxu0 0
    %1191 = vmatprep.subr.bf16.mxu0 0
    %1192 = vmatpush1.bf16.msra.mxu0 0
    %1193 = vmatprep.subr.bf16.mxu0 0
    %1194 = vmatpush1.bf16.msra.mxu0 0
    %1195 = vmatprep.subr.bf16.mxu0 0
    %1196 = vmatpush1.bf16.msra.mxu0 0
    %1197 = vmatprep.subr.bf16.mxu0 0
    %1198 = vmatpush1.bf16.msra.mxu0 0
    %1199 = vmatprep.subr.bf16.mxu0 0
    %1200 = vmatpush1.bf16.msra.mxu0 0
    %1201 = vmatprep.mubr.bf16.mxu0 0
    %1202 = vmatmul.mubr.bf16.gmra.mrb[0].mxu0 %v1167
    %v1203 = vpop.f32.mrb[0].mxu0
    %v1204 = vadd.f32 %v1164, %v1203
    %v1205 = vpop.f32.mrb[0].mxu0
    %v1206 = vpop.f32.mrb[0].mxu0
    %v1207 = vpop.f32.mrb[0].mxu0
    %1208 = vdwg.mxu0
    %v1209 = vld [vmem:[%s19] sm:$0xff]
    %v1210 = vld [vmem:[%s19 + $0x8] sm:$0xff]
    %v1211 = vld [vmem:[%s19 + $0x10] sm:$0xff]
    %v1212 = vld [vmem:[%s19 + $0x18] sm:$0xff]
    %v1213 = vpack.c.bf16 %v1210, %v1209
    %v1214 = vpack.c.bf16 %v1212, %v1211
    %v1215 = vld [vmem:[%s20] sm:$0x1]
    %v1217 = vlaneseq
    %v1218 = vshrl.u32 %v1217, 7
    %v1219 = vsub.s32 0, %v1218
    %v1220 = vrot.slane %v1215, %v1219
    %v1223 = vrot.slane %v1098, 1
    %v1225 = vsel %vm97, %v1223, 0
    %1227 = vmatprep.subr.bf16.mxu0 0
    %1228 = vmatpush1.bf16.msra.mxu0 %v1213
    %1229 = vmatprep.subr.bf16.mxu0 0
    %1230 = vmatpush1.bf16.msra.mxu0 %v1214
    %1231 = vmatprep.subr.bf16.mxu0 0
    %1232 = vmatpush1.bf16.msra.mxu0 0
    %1233 = vmatprep.subr.bf16.mxu0 0
    %1234 = vmatpush1.bf16.msra.mxu0 0
    %1235 = vmatprep.subr.bf16.mxu0 0
    %1236 = vmatpush1.bf16.msra.mxu0 0
    %1237 = vmatprep.subr.bf16.mxu0 0
    %1238 = vmatpush1.bf16.msra.mxu0 0
    %1239 = vmatprep.subr.bf16.mxu0 0
    %1240 = vmatpush1.bf16.msra.mxu0 0
    %1241 = vmatprep.subr.bf16.mxu0 0
    %1242 = vmatpush1.bf16.msra.mxu0 0
    %1243 = vmatprep.subr.bf16.mxu0 0
    %1244 = vmatpush1.bf16.msra.mxu0 0
    %1245 = vmatprep.subr.bf16.mxu0 0
    %1246 = vmatpush1.bf16.msra.mxu0 0
    %1247 = vmatprep.subr.bf16.mxu0 0
    %1248 = vmatpush1.bf16.msra.mxu0 0
    %1249 = vmatprep.subr.bf16.mxu0 0
    %1250 = vmatpush1.bf16.msra.mxu0 0
    %1251 = vmatprep.subr.bf16.mxu0 0
    %1252 = vmatpush1.bf16.msra.mxu0 0
    %1253 = vmatprep.subr.bf16.mxu0 0
    %1254 = vmatpush1.bf16.msra.mxu0 0
    %1255 = vmatprep.subr.bf16.mxu0 0
    %1256 = vmatpush1.bf16.msra.mxu0 0
    %1257 = vmatprep.subr.bf16.mxu0 0
    %1258 = vmatpush1.bf16.msra.mxu0 0
    %1259 = vmatprep.mubr.bf16.mxu0 0
    %1260 = vmatmul.mubr.bf16.gmra.mrb[0].mxu0 %v1225
    %v1261 = vpop.f32.mrb[0].mxu0
    %v1262 = vadd.f32 %v1220, %v1261
    %v1263 = vpop.f32.mrb[0].mxu0
    %v1264 = vpop.f32.mrb[0].mxu0
    %v1265 = vpop.f32.mrb[0].mxu0
    %1266 = vdwg.mxu0
    %1268 = vrot.lane.b32.xlu0 %v1204, 32
    %v1269 = vpop.permute.xlu0 %1268
    %v1271 = vsel %vm97, %v1151, %v1269
    %vm1272 = vcmask 302080
    %v1273 = vsel %vm1272, %v1271, 0.0
    %v1275 = vrot.slane %v1262, 6
    %1276 = vrot.lane.b32.xlu0 %v1275, 32
    %v1277 = vpop.permute.xlu0 %1276
    %v1279 = vsel %vm97, %v1091, %v1277
    %vm1280 = vcmask 293888
    %v1281 = vsel %vm1280, %v1279, 0.0
    %v1282 = vsel %vm252, %v1273, %v1281
    %1283 = vst [vmem:[#allocation6] sm:$0xff] %v1282
    // Predicated region
    $region98: #{tpu_custom_call.1} parent=1 // pred_check
      _
    $region99: #{tpu_custom_call.1} parent=1 // pred_check_branch
      %1285 = sbr.rel (0) target = $region101
    $region100: #{tpu_custom_call.1} parent=1 // pred_region
      %s1287 = ssub.s32 256, 256
      %1288 = vsyncadd [#allocation4], %s1287
      %s1289 = sshll.u32 [#allocation5], 4
      %s1290 = int_to_ptr.vmem [resolvable:$true] %s1289
      %1295 = dma.vmem_to_hbm [thread:$0]  %s1290, 256, %s23, [#allocation4], 128, 128, 8
    $region101: #{tpu_custom_call.1} parent=1 // pred_fallthru
      _
    // Predicated region
    $region102: #{tpu_custom_call.1} parent=1 // pred_check
      _
    $region103: #{tpu_custom_call.1} parent=1 // pred_check_branch
      %1297 = sbr.rel (0) target = $region105
    $region104: #{tpu_custom_call.1} parent=1 // pred_region
      %s1299 = ssub.s32 128, 128
      %1300 = vsyncadd [#allocation7], %s1299
      %s1302 = sshll.u32 [#allocation6], 4
      %s1303 = int_to_ptr.vmem [resolvable:$true] %s1302
      %1305 = dma.vmem_to_hbm [thread:$0]  %s1303, 128, %s24, [#allocation7]
    $region105: #{tpu_custom_call.1} parent=1 // pred_fallthru
      _
    // Predicated region
    $region106: #{tpu_custom_call.1} parent=1 // pred_check
      _
    $region107: #{tpu_custom_call.1} parent=1 // pred_check_branch
      %1307 = sbr.rel (0) target = $region109
    $region108: #{tpu_custom_call.1} parent=1 // pred_region
      %1308 = dma.done [#allocation4], 256
    $region109: #{tpu_custom_call.1} parent=1 // pred_fallthru
      _
    // Predicated region
    $region110: #{tpu_custom_call.1} parent=1 // pred_check
      _
    $region111: #{tpu_custom_call.1} parent=1 // pred_check_branch
      %1310 = sbr.rel (0) target = $region113
    $region112: #{tpu_custom_call.1} parent=1 // pred_region
      %1311 = dma.done [#allocation7], 128
    $region113: #{tpu_custom_call.1} parent=1 // pred_fallthru
      _
    %1312 = vsyncpa [#allocation3], 1
    %1313 = vsyncpa [#allocation4], 1
    %1314 = vsyncpa [#allocation7], 1

</llo_original>
